<compile_context>
chip_gen: v7x
topology: tpu7x:2x2x1
jax: 0.10.0
libtpu: 0.0.40
codegen_flags: <defaults>
</compile_context>

<pallas_src>
import functools

import jax
import jax.numpy as jnp
from jax.experimental import pallas as pl
from jax.experimental.pallas import tpu as pltpu

_HIDDEN = 768


def _round_up(x, m):
    return (x + m - 1) // m * m


def _gelu(h, approximate):
    # approximate=True  -> tanh GELU (tanh on the EUP slot; VALU-light)
    # approximate=False -> exact erf GELU (torch F.gelu numerics; VALU-heavy)
    return jax.nn.gelu(h, approximate=approximate)


def _tiled_kernel(x_ref, w1_ref, b1_ref, w2_ref, b2_ref, o_ref, *, approximate):
    # One row-tile per grid step; weights/biases are VMEM-resident (constant
    # index_map, single-buffered).  bf16 MXU operands, f32 accumulate, f32 GELU.
    x = x_ref[...].astype(jnp.bfloat16)
    h = jnp.dot(x, w1_ref[...], preferred_element_type=jnp.float32) + b1_ref[...]
    h = _gelu(h, approximate)
    h = jnp.dot(h.astype(jnp.bfloat16), w2_ref[...],
                preferred_element_type=jnp.float32) + b2_ref[...]
    h = _gelu(h, approximate)
    o_ref[...] = h.astype(o_ref.dtype)


def _small_kernel(x_ref, w1_ref, b1_ref, w2_hbm, b2_ref, o_ref,
                  w2_vmem, w2_sem, *, approximate):
    # Single grid step: start W2's HBM->VMEM DMA immediately so it overlaps
    # matmul1 + GELU; wait only right before the second dot needs it.
    cp = pltpu.make_async_copy(w2_hbm, w2_vmem, w2_sem)
    cp.start()
    x = x_ref[...].astype(jnp.bfloat16)
    h = jnp.dot(x, w1_ref[...], preferred_element_type=jnp.float32) + b1_ref[...]
    h = _gelu(h, approximate)
    cp.wait()
    h = jnp.dot(h.astype(jnp.bfloat16), w2_vmem[...],
                preferred_element_type=jnp.float32) + b2_ref[...]
    h = _gelu(h, approximate)
    o_ref[...] = h.astype(o_ref.dtype)


def _cost(m_rows, h):
    return pl.CostEstimate(
        flops=2 * 2 * m_rows * h * h,            # two matmuls
        transcendentals=2 * m_rows * h,          # two GELUs (one tanh/erf per elem)
        bytes_accessed=(2 * h * h * 2            # bf16 weights (fetched once)
                        + 2 * h * 4              # biases
                        + m_rows * h * 4 * 2),   # x in + out (f32)
    )


def news_id_embedding(x, w1, b1, w2, b2, *, tile_m=None, approximate_gelu=True):
    """Fused NewsIdEmbedding forward.

    x:  [B, L, H] float32 (H = 768).
    w*: [H, H] weights stored as (in, out)  (transpose of torch Linear.weight).
    b*: [H] biases.
    approximate_gelu: True (default) = tanh GELU (fastest; EUP slot).
                      False = exact erf GELU (torch F.gelu numerics).
    """
    B, L, H = x.shape
    assert H == _HIDDEN
    M = B * L

    if tile_m is None:
        tile_m = 1024 if M >= 8192 else 512

    # bf16 weights; f32 biases added to the f32 accumulator.
    w1_bf = w1.astype(jnp.bfloat16)
    w2_bf = w2.astype(jnp.bfloat16)
    b1_2d = b1.reshape(1, H).astype(jnp.float32)
    b2_2d = b2.reshape(1, H).astype(jnp.float32)

    x2d = x.reshape(M, H)

    if M <= tile_m:
        # ---------- tiny / medium M: one grid step, manual W2 DMA overlap ------
        m_pad = max(8, _round_up(M, 8))          # sublane-aligned; pad is cheap here
        if m_pad != M:
            x2d = jnp.pad(x2d, ((0, m_pad - M), (0, 0)))

        out2d = pl.pallas_call(
            functools.partial(_small_kernel, approximate=approximate_gelu),
            out_shape=jax.ShapeDtypeStruct((m_pad, H), x.dtype),
            grid=(1,),
            in_specs=[
                pl.BlockSpec((m_pad, H), lambda i: (0, 0)),
                pl.BlockSpec((H, H), lambda i: (0, 0)),
                pl.BlockSpec((1, H), lambda i: (0, 0)),
                pl.BlockSpec(memory_space=pl.ANY),      # W2: raw HBM, manual DMA
                pl.BlockSpec((1, H), lambda i: (0, 0)),
            ],
            out_specs=pl.BlockSpec((m_pad, H), lambda i: (0, 0)),
            scratch_shapes=[
                pltpu.VMEM((H, H), jnp.bfloat16),       # W2 landing buffer
                pltpu.SemaphoreType.DMA(()),
            ],
            compiler_params=pltpu.CompilerParams(
                dimension_semantics=("arbitrary",)),
            cost_estimate=_cost(m_pad, H),
        )(x2d, w1_bf, b1_2d, w2_bf, b2_2d)

        if m_pad != M:
            out2d = out2d[:M]
        return out2d.reshape(B, L, H)

    # ---------- large M: row-tiled pipeline, resident single-buffered weights ---
    tm = tile_m
    for cand in range(tile_m, tile_m // 2 - 1, -8):
        if M % cand == 0:
            tm = cand        # divisor of M -> no wrapper-side pad / slice HBM pass
            break
    m_pad = _round_up(M, tm)
    if m_pad != M:
        x2d = jnp.pad(x2d, ((0, m_pad - M), (0, 0)))   # ragged fallback only

    resident = pl.Buffered(1)   # constant block index -> second buffer is waste
    out2d = pl.pallas_call(
        functools.partial(_tiled_kernel, approximate=approximate_gelu),
        out_shape=jax.ShapeDtypeStruct((m_pad, H), x.dtype),
        grid=(m_pad // tm,),
        in_specs=[
            pl.BlockSpec((tm, H), lambda i: (i, 0)),                         # x tile
            pl.BlockSpec((H, H), lambda i: (0, 0), pipeline_mode=resident),  # W1
            pl.BlockSpec((1, H), lambda i: (0, 0), pipeline_mode=resident),  # b1
            pl.BlockSpec((H, H), lambda i: (0, 0), pipeline_mode=resident),  # W2
            pl.BlockSpec((1, H), lambda i: (0, 0), pipeline_mode=resident),  # b2
        ],
        out_specs=pl.BlockSpec((tm, H), lambda i: (i, 0)),
        compiler_params=pltpu.CompilerParams(
            dimension_semantics=("parallel",),          # v7x: shard steps on 2 TCs
            vmem_limit_bytes=32 * 1024 * 1024,          # room for tm=1024 tiles
        ),
        cost_estimate=_cost(m_pad, H),
    )(x2d, w1_bf, b1_2d, w2_bf, b2_2d)

    if m_pad != M:
        out2d = out2d[:M]
    return out2d.reshape(B, L, H)


if __name__ == "__main__":
    # Module hard-codes hidden_size=768; curr_len=5 per the spec docstring.
    batch, curr_len, hidden = 2, 5, 768

    key = jax.random.PRNGKey(0)
    kx, kw1, kb1, kw2, kb2 = jax.random.split(key, 5)

    x = jax.random.normal(kx, (batch, curr_len, hidden), dtype=jnp.float32)

    # Deterministic synthetic parameters (shapes from nn.Linear(768, 768)).
    # PyTorch Linear weight is [out, in]; we store the transpose [in, out].
    scale = 1.0 / jnp.sqrt(jnp.float32(hidden))
    w1 = jax.random.normal(kw1, (hidden, hidden), dtype=jnp.float32) * scale
    b1 = jax.random.normal(kb1, (hidden,), dtype=jnp.float32) * scale
    w2 = jax.random.normal(kw2, (hidden, hidden), dtype=jnp.float32) * scale
    b2 = jax.random.normal(kb2, (hidden,), dtype=jnp.float32) * scale

    # --- tiny-M path (grid=(1,), manual W2 DMA overlap) ---
    out = news_id_embedding(x, w1, b1, w2, b2)
    jax.block_until_ready(out)
    assert out.shape == (batch, curr_len, hidden)

    # f32 exact-erf reference (the torch module's numerics). Kernel uses bf16
    # MXU operands + tanh GELU, so the tolerance is loosened accordingly.
    ref = jax.nn.gelu(x @ w1 + b1, approximate=False)
    ref = jax.nn.gelu(ref @ w2 + b2, approximate=False)
    assert jnp.allclose(out, ref, atol=5e-2, rtol=5e-2)

    # Tight check against a reference mirroring the kernel's math exactly
    # (bf16 matmul operands, f32 accumulate, tanh GELU).
    def ref_matched(xv):
        h = jnp.dot(xv.reshape(-1, hidden).astype(jnp.bfloat16),
                    w1.astype(jnp.bfloat16),
                    preferred_element_type=jnp.float32) + b1
        h = jax.nn.gelu(h, approximate=True)
        h = jnp.dot(h.astype(jnp.bfloat16), w2.astype(jnp.bfloat16),
                    preferred_element_type=jnp.float32) + b2
        h = jax.nn.gelu(h, approximate=True)
        return h.reshape(xv.shape)

    assert jnp.allclose(out, ref_matched(x), atol=1e-2, rtol=1e-2)

    # --- large-M path (row-tiled, resident weights, parallel grid) ---
    x_big = jax.random.normal(kx, (2, 320, hidden), dtype=jnp.float32)
    out_big = news_id_embedding(x_big, w1, b1, w2, b2)
    jax.block_until_ready(out_big)
    assert out_big.shape == x_big.shape
    assert jnp.allclose(out_big, ref_matched(x_big), atol=1e-2, rtol=1e-2)

    print("KERNEL_OK")
</pallas_src>

<mosaic_0001>
module attributes {stable_mosaic.version = 11 : i64} {
  func.func @_small_kernel(%arg0: i32, %arg1: memref<16x768xf32, #tpu.memory_space<vmem>>, %arg2: memref<768x768xbf16, #tpu.memory_space<vmem>>, %arg3: memref<1x768xf32, #tpu.memory_space<vmem>>, %arg4: memref<768x768xbf16, #tpu.memory_space<any>>, %arg5: memref<1x768xf32, #tpu.memory_space<vmem>>, %arg6: memref<16x768xf32, #tpu.memory_space<vmem>>, %arg7: memref<768x768xbf16, #tpu.memory_space<vmem>>, %arg8: memref<!tpu.dma_semaphore, #tpu.memory_space<semaphore_mem>>) attributes {dimension_semantics = [#tpu.dimension_semantics<arbitrary>], iteration_bounds = array<i64: 1>, scalar_prefetch = 0 : i64, scratch_operands = 2 : i64, tpu.core_type = #tpu.core_type<tc>, window_params = [{pipeline_mode = #tpu.pipeline_mode<synchronous>, transform_indices = @transform_0, window_bounds = array<i64: 16, 768>}, {pipeline_mode = #tpu.pipeline_mode<synchronous>, transform_indices = @transform_1, window_bounds = array<i64: 768, 768>}, {pipeline_mode = #tpu.pipeline_mode<synchronous>, transform_indices = @transform_2, window_bounds = array<i64: 1, 768>}, {}, {pipeline_mode = #tpu.pipeline_mode<synchronous>, transform_indices = @transform_4, window_bounds = array<i64: 1, 768>}, {pipeline_mode = #tpu.pipeline_mode<synchronous>, transform_indices = @transform_5, window_bounds = array<i64: 16, 768>}]} {
    tpu.enqueue_dma source(%arg4 : memref<768x768xbf16, #tpu.memory_space<any>>) target(%arg7 : memref<768x768xbf16, #tpu.memory_space<vmem>>) target_semaphore(%arg8 : memref<!tpu.dma_semaphore, #tpu.memory_space<semaphore_mem>>)
    %c0 = arith.constant 0 : index
    %c0_0 = arith.constant 0 : index
    %0 = vector.load %arg1[%c0, %c0_0] : memref<16x768xf32, #tpu.memory_space<vmem>>, vector<16x768xf32>
    %1 = arith.truncf %0 : vector<16x768xf32> to vector<16x768xbf16>
    %c0_1 = arith.constant 0 : index
    %c0_2 = arith.constant 0 : index
    %2 = vector.load %arg2[%c0_1, %c0_2] : memref<768x768xbf16, #tpu.memory_space<vmem>>, vector<768x768xbf16>
    %cst = arith.constant dense<0.000000e+00> : vector<16x768xf32>
    %3 = tpu.matmul %1, %2, %cst {dimension_numbers = #tpu.dot_dimension_numbers<[1], [0], [0], [1], [0, 0, 1, 1], [], []>} : vector<16x768xbf16>, vector<768x768xbf16>, vector<16x768xf32> -> vector<16x768xf32>
    %c0_3 = arith.constant 0 : index
    %c0_4 = arith.constant 0 : index
    %4 = vector.load %arg3[%c0_3, %c0_4] : memref<1x768xf32, #tpu.memory_space<vmem>>, vector<1x768xf32>
    %5 = vector.broadcast %4 : vector<1x768xf32> to vector<16x768xf32>
    %6 = arith.addf %3, %5 : vector<16x768xf32>
    %7 = arith.mulf %6, %6 : vector<16x768xf32>
    %8 = arith.mulf %6, %7 : vector<16x768xf32>
    %cst_5 = arith.constant 4.471500e-02 : f32
    %9 = vector.broadcast %cst_5 : f32 to vector<16x768xf32>
    %10 = arith.mulf %9, %8 : vector<16x768xf32>
    %11 = arith.addf %6, %10 : vector<16x768xf32>
    %cst_6 = arith.constant 0.797884583 : f32
    %12 = vector.broadcast %cst_6 : f32 to vector<16x768xf32>
    %13 = arith.mulf %12, %11 : vector<16x768xf32>
    %14 = math.tanh %13 : vector<16x768xf32>
    %cst_7 = arith.constant 1.000000e+00 : f32
    %15 = vector.broadcast %cst_7 : f32 to vector<16x768xf32>
    %16 = arith.addf %15, %14 : vector<16x768xf32>
    %cst_8 = arith.constant 5.000000e-01 : f32
    %17 = vector.broadcast %cst_8 : f32 to vector<16x768xf32>
    %18 = arith.mulf %17, %16 : vector<16x768xf32>
    %19 = arith.mulf %6, %18 : vector<16x768xf32>
    tpu.wait_dma2 semaphore(%arg8 : memref<!tpu.dma_semaphore, #tpu.memory_space<semaphore_mem>>) src(%arg4 : memref<768x768xbf16, #tpu.memory_space<any>>) dst(%arg7 : memref<768x768xbf16, #tpu.memory_space<vmem>>)
    %20 = arith.truncf %19 : vector<16x768xf32> to vector<16x768xbf16>
    %c0_9 = arith.constant 0 : index
    %c0_10 = arith.constant 0 : index
    %21 = vector.load %arg7[%c0_9, %c0_10] : memref<768x768xbf16, #tpu.memory_space<vmem>>, vector<768x768xbf16>
    %cst_11 = arith.constant dense<0.000000e+00> : vector<16x768xf32>
    %22 = tpu.matmul %20, %21, %cst_11 {dimension_numbers = #tpu.dot_dimension_numbers<[1], [0], [0], [1], [0, 0, 1, 1], [], []>} : vector<16x768xbf16>, vector<768x768xbf16>, vector<16x768xf32> -> vector<16x768xf32>
    %c0_12 = arith.constant 0 : index
    %c0_13 = arith.constant 0 : index
    %23 = vector.load %arg5[%c0_12, %c0_13] : memref<1x768xf32, #tpu.memory_space<vmem>>, vector<1x768xf32>
    %24 = vector.broadcast %23 : vector<1x768xf32> to vector<16x768xf32>
    %25 = arith.addf %22, %24 : vector<16x768xf32>
    %26 = arith.mulf %25, %25 : vector<16x768xf32>
    %27 = arith.mulf %25, %26 : vector<16x768xf32>
    %cst_14 = arith.constant 4.471500e-02 : f32
    %28 = vector.broadcast %cst_14 : f32 to vector<16x768xf32>
    %29 = arith.mulf %28, %27 : vector<16x768xf32>
    %30 = arith.addf %25, %29 : vector<16x768xf32>
    %cst_15 = arith.constant 0.797884583 : f32
    %31 = vector.broadcast %cst_15 : f32 to vector<16x768xf32>
    %32 = arith.mulf %31, %30 : vector<16x768xf32>
    %33 = math.tanh %32 : vector<16x768xf32>
    %cst_16 = arith.constant 1.000000e+00 : f32
    %34 = vector.broadcast %cst_16 : f32 to vector<16x768xf32>
    %35 = arith.addf %34, %33 : vector<16x768xf32>
    %cst_17 = arith.constant 5.000000e-01 : f32
    %36 = vector.broadcast %cst_17 : f32 to vector<16x768xf32>
    %37 = arith.mulf %36, %35 : vector<16x768xf32>
    %38 = arith.mulf %25, %37 : vector<16x768xf32>
    %c0_18 = arith.constant 0 : index
    %c0_19 = arith.constant 0 : index
    %39 = vector.load %arg6[%c0_18, %c0_19] : memref<16x768xf32, #tpu.memory_space<vmem>>, vector<16x768xf32>
    tpu.vector_store %arg6[%c0_18, %c0_19], %38 {strides = array<i32>} : memref<16x768xf32, #tpu.memory_space<vmem>>, vector<16x768xf32>,
    return
  }
  func.func @transform_0(%arg0: i32) -> (i32, i32) {
    %c0_i32 = arith.constant 0 : i32
    %c0_i32_0 = arith.constant 0 : i32
    %c0_i32_1 = arith.constant 0 : i32
    return %c0_i32, %c0_i32_0 : i32, i32
  }
  func.func @transform_1(%arg0: i32) -> (i32, i32) {
    %c0_i32 = arith.constant 0 : i32
    %c0_i32_0 = arith.constant 0 : i32
    %c0_i32_1 = arith.constant 0 : i32
    return %c0_i32, %c0_i32_0 : i32, i32
  }
  func.func @transform_2(%arg0: i32) -> (i32, i32) {
    %c0_i32 = arith.constant 0 : i32
    %c0_i32_0 = arith.constant 0 : i32
    %c0_i32_1 = arith.constant 0 : i32
    return %c0_i32, %c0_i32_0 : i32, i32
  }
  func.func @transform_4(%arg0: i32) -> (i32, i32) {
    %c0_i32 = arith.constant 0 : i32
    %c0_i32_0 = arith.constant 0 : i32
    %c0_i32_1 = arith.constant 0 : i32
    return %c0_i32, %c0_i32_0 : i32, i32
  }
  func.func @transform_5(%arg0: i32) -> (i32, i32) {
    %c0_i32 = arith.constant 0 : i32
    %c0_i32_0 = arith.constant 0 : i32
    %c0_i32_1 = arith.constant 0 : i32
    return %c0_i32, %c0_i32_0 : i32, i32
  }
}

</mosaic_0001>

<llo_original>
// kernel: tpu_custom_call.1
$region0: #{tpu_custom_call.1}
  #allocation0 [shape = 'u32[]', space=smem, size = 0x4, offset = 0x4, fixed_abs, tag = 'smem constant byte address 0x4 - core index']
  #allocation1 [shape = 'u32[144,128]{1,0:T(1,128)}', space=vmem, size = 0x12000, scoped, tag = 'internal scratch']
  #allocation2 [shape = 'bf16[768,768]{1,0:T(16,128)(2,1)}', space=vmem, size = 0x120000, scoped, tag = 'scratch operand']
  #allocation3 [shape = 's32[1]{0}', space=sflag, size = 0x4, scoped, tag = 'scratch operand']
  #allocation13 [shape = 's32[]', space=sflag, size = 0x4, offset = 0, fixed_abs, tag = 'sflag constant byte address 0x0 - dummy sync flag']
  %s0 = inlined_call_operand.hbm [shape: f32[16,768], index: 0, kind: input, shape index: {}]
  %s1 = inlined_call_operand.hbm [shape: bf16[768,768], index: 1, kind: input, shape index: {}]
  %s2 = inlined_call_operand.hbm [shape: f32[1,768], index: 2, kind: input, shape index: {}]
  %s3 = inlined_call_operand.hbm [shape: bf16[768,768], index: 3, kind: input, shape index: {}]
  %s4 = inlined_call_operand.hbm [shape: f32[1,768], index: 4, kind: input, shape index: {}]
  %s5 = inlined_call_operand.hbm [shape: f32[16,768], index: 5, kind: output, shape index: {}]
  %s6 = sld [smem:[#allocation0]]
  $region42: #{tpu_custom_call.1} parent=0
    _
  %s8 = ssub.s32 1, %s6
  %s9 = scalar_select 0, %s8, %s6
  $region1: #{tpu_custom_call.1} parent=0
    #allocation4 [shape = 'u8[49152]{0}', space=vmem, size = 0xc000, scoped, tag = 'input window, operand 0, single buffered']
    #allocation5 [shape = 's32[1]{0}', space=sflag, size = 0x4, scoped, tag = 'scoped memory for tpu_custom_call.1']
    #allocation6 [shape = 's32[1]{0}', space=sflag, size = 0x4, scoped, tag = 'scoped memory for tpu_custom_call.1']
    #allocation7 [shape = 'u8[1179648]{0}', space=vmem, size = 0x120000, scoped, tag = 'input window, operand 1, single buffered']
    #allocation8 [shape = 's32[1]{0}', space=sflag, size = 0x4, scoped, tag = 'scoped memory for tpu_custom_call.1']
    #allocation9 [shape = 'u8[3072]{0}', space=vmem, size = 0xc00, scoped, tag = 'input window, operand 2, single buffered']
    #allocation10 [shape = 'u8[3072]{0}', space=vmem, size = 0xc00, scoped, tag = 'input window, operand 4, single buffered']
    #allocation11 [shape = 's32[1]{0}', space=sflag, size = 0x4, scoped, tag = 'scoped memory for tpu_custom_call.1']
    #allocation12 [shape = 'u8[49152]{0}', space=vmem, size = 0xc000, scoped, tag = 'output window, operand 0, single buffered']
    #allocation14 [shape = 'u32[9]{0}', space=smem, size = 0x24, scoped, tag = 'DMA stride descriptor']
    %10 = vsyncpa [#allocation5], 0
    %11 = vsyncpa [#allocation8], 0
    %12 = vsyncpa [#allocation11], 0
    %13 = vsyncpa [#allocation6], 0
    // Predicated region
    $region2: #{tpu_custom_call.1} parent=1 // pred_check
      _
    $region3: #{tpu_custom_call.1} parent=1 // pred_check_branch
      %15 = sbr.rel (0) target = $region5
    $region4: #{tpu_custom_call.1} parent=1 // pred_region
      %s17 = ssub.s32 1536, 1536
      %18 = vsyncadd [#allocation5], %s17
      %s19 = sshll.u32 [#allocation4], 4
      %s20 = int_to_ptr.vmem [resolvable:$true] %s19
      %25 = dma.hbm_to_vmem [thread:$0]  %s0, 1536, %s20, [#allocation5], 768, 768, 48
    $region5: #{tpu_custom_call.1} parent=1 // pred_fallthru
      _
    // Predicated region
    $region6: #{tpu_custom_call.1} parent=1 // pred_check
      _
    $region7: #{tpu_custom_call.1} parent=1 // pred_check_branch
      %27 = sbr.rel (0) target = $region9
    $region8: #{tpu_custom_call.1} parent=1 // pred_region
      %s29 = ssub.s32 36864, 36864
      %30 = vsyncadd [#allocation8], %s29
      %s31 = sshll.u32 [#allocation7], 4
      %s32 = int_to_ptr.vmem [resolvable:$true] %s31
      %37 = dma.hbm_to_vmem [thread:$0]  %s1, 36864, %s32, [#allocation8], 384, 384, 24
    $region9: #{tpu_custom_call.1} parent=1 // pred_fallthru
      _
    // Predicated region
    $region10: #{tpu_custom_call.1} parent=1 // pred_check
      _
    $region11: #{tpu_custom_call.1} parent=1 // pred_check_branch
      %39 = sbr.rel (0) target = $region13
    $region12: #{tpu_custom_call.1} parent=1 // pred_region
      %s41 = ssub.s32 96, 96
      %42 = vsyncadd [#allocation8], %s41
      %s44 = sshll.u32 [#allocation9], 4
      %s45 = int_to_ptr.vmem [resolvable:$true] %s44
      %47 = dma.hbm_to_vmem [thread:$0]  %s2, 96, %s45, [#allocation8]
    $region13: #{tpu_custom_call.1} parent=1 // pred_fallthru
      _
    // Predicated region
    $region14: #{tpu_custom_call.1} parent=1 // pred_check
      _
    $region15: #{tpu_custom_call.1} parent=1 // pred_check_branch
      %49 = sbr.rel (0) target = $region17
    $region16: #{tpu_custom_call.1} parent=1 // pred_region
      %s51 = ssub.s32 96, 96
      %52 = vsyncadd [#allocation11], %s51
      %s54 = sshll.u32 [#allocation10], 4
      %s55 = int_to_ptr.vmem [resolvable:$true] %s54
      %57 = dma.hbm_to_vmem [thread:$0]  %s4, 96, %s55, [#allocation11]
    $region17: #{tpu_custom_call.1} parent=1 // pred_fallthru
      _
    // Predicated region
    $region18: #{tpu_custom_call.1} parent=1 // pred_check
      _
    $region19: #{tpu_custom_call.1} parent=1 // pred_check_branch
      %59 = sbr.rel (0) target = $region21
    $region20: #{tpu_custom_call.1} parent=1 // pred_region
      %60 = dma.done [#allocation5], 1536
    $region21: #{tpu_custom_call.1} parent=1 // pred_fallthru
      _
    // Predicated region
    $region22: #{tpu_custom_call.1} parent=1 // pred_check
      _
    $region23: #{tpu_custom_call.1} parent=1 // pred_check_branch
      %62 = sbr.rel (0) target = $region25
    $region24: #{tpu_custom_call.1} parent=1 // pred_region
      %63 = dma.done [#allocation8], 36864
    $region25: #{tpu_custom_call.1} parent=1 // pred_fallthru
      _
    // Predicated region
    $region26: #{tpu_custom_call.1} parent=1 // pred_check
      _
    $region27: #{tpu_custom_call.1} parent=1 // pred_check_branch
      %65 = sbr.rel (0) target = $region29
    $region28: #{tpu_custom_call.1} parent=1 // pred_region
      %66 = dma.done [#allocation8], 96
    $region29: #{tpu_custom_call.1} parent=1 // pred_fallthru
      _
    // Predicated region
    $region30: #{tpu_custom_call.1} parent=1 // pred_check
      _
    $region31: #{tpu_custom_call.1} parent=1 // pred_check_branch
      %68 = sbr.rel (0) target = $region33
    $region32: #{tpu_custom_call.1} parent=1 // pred_region
      %69 = dma.done [#allocation11], 96
    $region33: #{tpu_custom_call.1} parent=1 // pred_fallthru
      _
    %s71 = sshll.u32 1, 14
    %s72 = sxor.u32 4294967295, %s71
    %s74 = sld [smem:[#allocation0]]
    %s75 = sadd.s32 2, %s74
    %s77 = sshll.u32 7, 26
    %s78 = sxor.u32 4294967295, %s77
    %s79 = sand.u32 0, %s78
    %s80 = sshll.u32 %s75, 26
    %s81 = sor.u32 %s79, %s80
    %s82 = sshll.u32 [#allocation2], 4
    %s83 = int_to_ptr.vmem [resolvable:$true] %s82
    %86 = sst [smem:[#allocation14]] 768
    %s87 = scalar_lea.smem [#allocation14], 1
    %88 = sst [smem:[%s87]] 768
    %s89 = scalar_lea.smem [#allocation14], 2
    %90 = sst [smem:[%s89]] 6
    %s91 = scalar_lea.smem [#allocation14], 3
    %92 = sst [smem:[%s91]] 64
    %s93 = scalar_lea.smem [#allocation14], 4
    %94 = sst [smem:[%s93]] 128
    %s95 = scalar_lea.smem [#allocation14], 5
    %96 = sst [smem:[%s95]] 2
    %s97 = scalar_lea.smem [#allocation14], 6
    %98 = sst [smem:[%s97]] 384
    %s99 = scalar_lea.smem [#allocation14], 7
    %100 = sst [smem:[%s99]] 64
    %s101 = scalar_lea.smem [#allocation14], 8
    %102 = sst [smem:[%s101]] 4
    %104 = dma.general %s3, 36864, %s83, [#allocation3], [#allocation13], [#allocation14], %s81, 0
    %v105 = vld [vmem:[#allocation4] sm:$0xff]
    %v106 = vld [vmem:[#allocation4 + $0x8] sm:$0xff]
    %v107 = vld [vmem:[#allocation4 + $0x10] sm:$0xff]
    %v108 = vld [vmem:[#allocation4 + $0x18] sm:$0xff]
    %v109 = vld [vmem:[#allocation4 + $0x20] sm:$0xff]
    %v110 = vld [vmem:[#allocation4 + $0x28] sm:$0xff]
    %v111 = vld [vmem:[#allocation4 + $0x30] sm:$0xff]
    %v112 = vld [vmem:[#allocation4 + $0x38] sm:$0xff]
    %v113 = vld [vmem:[#allocation4 + $0x40] sm:$0xff]
    %v114 = vld [vmem:[#allocation4 + $0x48] sm:$0xff]
    %v115 = vld [vmem:[#allocation4 + $0x50] sm:$0xff]
    %v116 = vld [vmem:[#allocation4 + $0x58] sm:$0xff]
    %v117 = vpack.c.bf16 %v111, %v105
    %v118 = vpack.c.bf16 %v112, %v106
    %v119 = vpack.c.bf16 %v113, %v107
    %v120 = vpack.c.bf16 %v114, %v108
    %v121 = vpack.c.bf16 %v115, %v109
    %v122 = vpack.c.bf16 %v116, %v110
    %v123 = vld [vmem:[#allocation7] sm:$0xff]
    %v124 = vld [vmem:[#allocation7 + $0x8] sm:$0xff]
    %v125 = vld [vmem:[#allocation7 + $0x10] sm:$0xff]
    %v126 = vld [vmem:[#allocation7 + $0x18] sm:$0xff]
    %v127 = vld [vmem:[#allocation7 + $0x20] sm:$0xff]
    %v128 = vld [vmem:[#allocation7 + $0x28] sm:$0xff]
    %v129 = vld [vmem:[#allocation7 + $0x30] sm:$0xff]
    %v130 = vld [vmem:[#allocation7 + $0x38] sm:$0xff]
    %v131 = vld [vmem:[#allocation7 + $0x40] sm:$0xff]
    %v132 = vld [vmem:[#allocation7 + $0x48] sm:$0xff]
    %v133 = vld [vmem:[#allocation7 + $0x50] sm:$0xff]
    %v134 = vld [vmem:[#allocation7 + $0x58] sm:$0xff]
    %v135 = vld [vmem:[#allocation7 + $0x60] sm:$0xff]
    %v136 = vld [vmem:[#allocation7 + $0x68] sm:$0xff]
    %v137 = vld [vmem:[#allocation7 + $0x70] sm:$0xff]
    %v138 = vld [vmem:[#allocation7 + $0x78] sm:$0xff]
    %v139 = vld [vmem:[#allocation7 + $0x80] sm:$0xff]
    %v140 = vld [vmem:[#allocation7 + $0x88] sm:$0xff]
    %v141 = vld [vmem:[#allocation7 + $0x90] sm:$0xff]
    %v142 = vld [vmem:[#allocation7 + $0x98] sm:$0xff]
    %v143 = vld [vmem:[#allocation7 + $0xa0] sm:$0xff]
    %v144 = vld [vmem:[#allocation7 + $0xa8] sm:$0xff]
    %v145 = vld [vmem:[#allocation7 + $0xb0] sm:$0xff]
    %v146 = vld [vmem:[#allocation7 + $0xb8] sm:$0xff]
    %v147 = vld [vmem:[#allocation7 + $0xc0] sm:$0xff]
    %v148 = vld [vmem:[#allocation7 + $0xc8] sm:$0xff]
    %v149 = vld [vmem:[#allocation7 + $0xd0] sm:$0xff]
    %v150 = vld [vmem:[#allocation7 + $0xd8] sm:$0xff]
    %v151 = vld [vmem:[#allocation7 + $0xe0] sm:$0xff]
    %v152 = vld [vmem:[#allocation7 + $0xe8] sm:$0xff]
    %v153 = vld [vmem:[#allocation7 + $0xf0] sm:$0xff]
    %v154 = vld [vmem:[#allocation7 + $0xf8] sm:$0xff]
    %v155 = vld [vmem:[#allocation7 + $0x100] sm:$0xff]
    %v156 = vld [vmem:[#allocation7 + $0x108] sm:$0xff]
    %v157 = vld [vmem:[#allocation7 + $0x110] sm:$0xff]
    %v158 = vld [vmem:[#allocation7 + $0x118] sm:$0xff]
    %v159 = vld [vmem:[#allocation7 + $0x120] sm:$0xff]
    %v160 = vld [vmem:[#allocation7 + $0x128] sm:$0xff]
    %v161 = vld [vmem:[#allocation7 + $0x130] sm:$0xff]
    %v162 = vld [vmem:[#allocation7 + $0x138] sm:$0xff]
    %v163 = vld [vmem:[#allocation7 + $0x140] sm:$0xff]
    %v164 = vld [vmem:[#allocation7 + $0x148] sm:$0xff]
    %v165 = vld [vmem:[#allocation7 + $0x150] sm:$0xff]
    %v166 = vld [vmem:[#allocation7 + $0x158] sm:$0xff]
    %v167 = vld [vmem:[#allocation7 + $0x160] sm:$0xff]
    %v168 = vld [vmem:[#allocation7 + $0x168] sm:$0xff]
    %v169 = vld [vmem:[#allocation7 + $0x170] sm:$0xff]
    %v170 = vld [vmem:[#allocation7 + $0x178] sm:$0xff]
    %v171 = vld [vmem:[#allocation7 + $0x180] sm:$0xff]
    %v172 = vld [vmem:[#allocation7 + $0x188] sm:$0xff]
    %v173 = vld [vmem:[#allocation7 + $0x190] sm:$0xff]
    %v174 = vld [vmem:[#allocation7 + $0x198] sm:$0xff]
    %v175 = vld [vmem:[#allocation7 + $0x1a0] sm:$0xff]
    %v176 = vld [vmem:[#allocation7 + $0x1a8] sm:$0xff]
    %v177 = vld [vmem:[#allocation7 + $0x1b0] sm:$0xff]
    %v178 = vld [vmem:[#allocation7 + $0x1b8] sm:$0xff]
    %v179 = vld [vmem:[#allocation7 + $0x1c0] sm:$0xff]
    %v180 = vld [vmem:[#allocation7 + $0x1c8] sm:$0xff]
    %v181 = vld [vmem:[#allocation7 + $0x1d0] sm:$0xff]
    %v182 = vld [vmem:[#allocation7 + $0x1d8] sm:$0xff]
    %v183 = vld [vmem:[#allocation7 + $0x1e0] sm:$0xff]
    %v184 = vld [vmem:[#allocation7 + $0x1e8] sm:$0xff]
    %v185 = vld [vmem:[#allocation7 + $0x1f0] sm:$0xff]
    %v186 = vld [vmem:[#allocation7 + $0x1f8] sm:$0xff]
    %v187 = vld [vmem:[#allocation7 + $0x200] sm:$0xff]
    %v188 = vld [vmem:[#allocation7 + $0x208] sm:$0xff]
    %v189 = vld [vmem:[#allocation7 + $0x210] sm:$0xff]
    %v190 = vld [vmem:[#allocation7 + $0x218] sm:$0xff]
    %v191 = vld [vmem:[#allocation7 + $0x220] sm:$0xff]
    %v192 = vld [vmem:[#allocation7 + $0x228] sm:$0xff]
    %v193 = vld [vmem:[#allocation7 + $0x230] sm:$0xff]
    %v194 = vld [vmem:[#allocation7 + $0x238] sm:$0xff]
    %v195 = vld [vmem:[#allocation7 + $0x240] sm:$0xff]
    %v196 = vld [vmem:[#allocation7 + $0x248] sm:$0xff]
    %v197 = vld [vmem:[#allocation7 + $0x250] sm:$0xff]
    %v198 = vld [vmem:[#allocation7 + $0x258] sm:$0xff]
    %v199 = vld [vmem:[#allocation7 + $0x260] sm:$0xff]
    %v200 = vld [vmem:[#allocation7 + $0x268] sm:$0xff]
    %v201 = vld [vmem:[#allocation7 + $0x270] sm:$0xff]
    %v202 = vld [vmem:[#allocation7 + $0x278] sm:$0xff]
    %v203 = vld [vmem:[#allocation7 + $0x280] sm:$0xff]
    %v204 = vld [vmem:[#allocation7 + $0x288] sm:$0xff]
    %v205 = vld [vmem:[#allocation7 + $0x290] sm:$0xff]
    %v206 = vld [vmem:[#allocation7 + $0x298] sm:$0xff]
    %v207 = vld [vmem:[#allocation7 + $0x2a0] sm:$0xff]
    %v208 = vld [vmem:[#allocation7 + $0x2a8] sm:$0xff]
    %v209 = vld [vmem:[#allocation7 + $0x2b0] sm:$0xff]
    %v210 = vld [vmem:[#allocation7 + $0x2b8] sm:$0xff]
    %v211 = vld [vmem:[#allocation7 + $0x2c0] sm:$0xff]
    %v212 = vld [vmem:[#allocation7 + $0x2c8] sm:$0xff]
    %v213 = vld [vmem:[#allocation7 + $0x2d0] sm:$0xff]
    %v214 = vld [vmem:[#allocation7 + $0x2d8] sm:$0xff]
    %v215 = vld [vmem:[#allocation7 + $0x2e0] sm:$0xff]
    %v216 = vld [vmem:[#allocation7 + $0x2e8] sm:$0xff]
    %v217 = vld [vmem:[#allocation7 + $0x2f0] sm:$0xff]
    %v218 = vld [vmem:[#allocation7 + $0x2f8] sm:$0xff]
    %v219 = vld [vmem:[#allocation7 + $0x300] sm:$0xff]
    %v220 = vld [vmem:[#allocation7 + $0x308] sm:$0xff]
    %v221 = vld [vmem:[#allocation7 + $0x310] sm:$0xff]
    %v222 = vld [vmem:[#allocation7 + $0x318] sm:$0xff]
    %v223 = vld [vmem:[#allocation7 + $0x320] sm:$0xff]
    %v224 = vld [vmem:[#allocation7 + $0x328] sm:$0xff]
    %v225 = vld [vmem:[#allocation7 + $0x330] sm:$0xff]
    %v226 = vld [vmem:[#allocation7 + $0x338] sm:$0xff]
    %v227 = vld [vmem:[#allocation7 + $0x340] sm:$0xff]
    %v228 = vld [vmem:[#allocation7 + $0x348] sm:$0xff]
    %v229 = vld [vmem:[#allocation7 + $0x350] sm:$0xff]
    %v230 = vld [vmem:[#allocation7 + $0x358] sm:$0xff]
    %v231 = vld [vmem:[#allocation7 + $0x360] sm:$0xff]
    %v232 = vld [vmem:[#allocation7 + $0x368] sm:$0xff]
    %v233 = vld [vmem:[#allocation7 + $0x370] sm:$0xff]
    %v234 = vld [vmem:[#allocation7 + $0x378] sm:$0xff]
    %v235 = vld [vmem:[#allocation7 + $0x380] sm:$0xff]
    %v236 = vld [vmem:[#allocation7 + $0x388] sm:$0xff]
    %v237 = vld [vmem:[#allocation7 + $0x390] sm:$0xff]
    %v238 = vld [vmem:[#allocation7 + $0x398] sm:$0xff]
    %v239 = vld [vmem:[#allocation7 + $0x3a0] sm:$0xff]
    %v240 = vld [vmem:[#allocation7 + $0x3a8] sm:$0xff]
    %v241 = vld [vmem:[#allocation7 + $0x3b0] sm:$0xff]
    %v242 = vld [vmem:[#allocation7 + $0x3b8] sm:$0xff]
    %v243 = vld [vmem:[#allocation7 + $0x3c0] sm:$0xff]
    %v244 = vld [vmem:[#allocation7 + $0x3c8] sm:$0xff]
    %v245 = vld [vmem:[#allocation7 + $0x3d0] sm:$0xff]
    %v246 = vld [vmem:[#allocation7 + $0x3d8] sm:$0xff]
    %v247 = vld [vmem:[#allocation7 + $0x3e0] sm:$0xff]
    %v248 = vld [vmem:[#allocation7 + $0x3e8] sm:$0xff]
    %v249 = vld [vmem:[#allocation7 + $0x3f0] sm:$0xff]
    %v250 = vld [vmem:[#allocation7 + $0x3f8] sm:$0xff]
    %v251 = vld [vmem:[#allocation7 + $0x400] sm:$0xff]
    %v252 = vld [vmem:[#allocation7 + $0x408] sm:$0xff]
    %v253 = vld [vmem:[#allocation7 + $0x410] sm:$0xff]
    %v254 = vld [vmem:[#allocation7 + $0x418] sm:$0xff]
    %v255 = vld [vmem:[#allocation7 + $0x420] sm:$0xff]
    %v256 = vld [vmem:[#allocation7 + $0x428] sm:$0xff]
    %v257 = vld [vmem:[#allocation7 + $0x430] sm:$0xff]
    %v258 = vld [vmem:[#allocation7 + $0x438] sm:$0xff]
    %v259 = vld [vmem:[#allocation7 + $0x440] sm:$0xff]
    %v260 = vld [vmem:[#allocation7 + $0x448] sm:$0xff]
    %v261 = vld [vmem:[#allocation7 + $0x450] sm:$0xff]
    %v262 = vld [vmem:[#allocation7 + $0x458] sm:$0xff]
    %v263 = vld [vmem:[#allocation7 + $0x460] sm:$0xff]
    %v264 = vld [vmem:[#allocation7 + $0x468] sm:$0xff]
    %v265 = vld [vmem:[#allocation7 + $0x470] sm:$0xff]
    %v266 = vld [vmem:[#allocation7 + $0x478] sm:$0xff]
    %v267 = vld [vmem:[#allocation7 + $0x480] sm:$0xff]
    %v268 = vld [vmem:[#allocation7 + $0x488] sm:$0xff]
    %v269 = vld [vmem:[#allocation7 + $0x490] sm:$0xff]
    %v270 = vld [vmem:[#allocation7 + $0x498] sm:$0xff]
    %v271 = vld [vmem:[#allocation7 + $0x4a0] sm:$0xff]
    %v272 = vld [vmem:[#allocation7 + $0x4a8] sm:$0xff]
    %v273 = vld [vmem:[#allocation7 + $0x4b0] sm:$0xff]
    %v274 = vld [vmem:[#allocation7 + $0x4b8] sm:$0xff]
    %v275 = vld [vmem:[#allocation7 + $0x4c0] sm:$0xff]
    %v276 = vld [vmem:[#allocation7 + $0x4c8] sm:$0xff]
    %v277 = vld [vmem:[#allocation7 + $0x4d0] sm:$0xff]
    %v278 = vld [vmem:[#allocation7 + $0x4d8] sm:$0xff]
    %v279 = vld [vmem:[#allocation7 + $0x4e0] sm:$0xff]
    %v280 = vld [vmem:[#allocation7 + $0x4e8] sm:$0xff]
    %v281 = vld [vmem:[#allocation7 + $0x4f0] sm:$0xff]
    %v282 = vld [vmem:[#allocation7 + $0x4f8] sm:$0xff]
    %v283 = vld [vmem:[#allocation7 + $0x500] sm:$0xff]
    %v284 = vld [vmem:[#allocation7 + $0x508] sm:$0xff]
    %v285 = vld [vmem:[#allocation7 + $0x510] sm:$0xff]
    %v286 = vld [vmem:[#allocation7 + $0x518] sm:$0xff]
    %v287 = vld [vmem:[#allocation7 + $0x520] sm:$0xff]
    %v288 = vld [vmem:[#allocation7 + $0x528] sm:$0xff]
    %v289 = vld [vmem:[#allocation7 + $0x530] sm:$0xff]
    %v290 = vld [vmem:[#allocation7 + $0x538] sm:$0xff]
    %v291 = vld [vmem:[#allocation7 + $0x540] sm:$0xff]
    %v292 = vld [vmem:[#allocation7 + $0x548] sm:$0xff]
    %v293 = vld [vmem:[#allocation7 + $0x550] sm:$0xff]
    %v294 = vld [vmem:[#allocation7 + $0x558] sm:$0xff]
    %v295 = vld [vmem:[#allocation7 + $0x560] sm:$0xff]
    %v296 = vld [vmem:[#allocation7 + $0x568] sm:$0xff]
    %v297 = vld [vmem:[#allocation7 + $0x570] sm:$0xff]
    %v298 = vld [vmem:[#allocation7 + $0x578] sm:$0xff]
    %v299 = vld [vmem:[#allocation7 + $0x580] sm:$0xff]
    %v300 = vld [vmem:[#allocation7 + $0x588] sm:$0xff]
    %v301 = vld [vmem:[#allocation7 + $0x590] sm:$0xff]
    %v302 = vld [vmem:[#allocation7 + $0x598] sm:$0xff]
    %v303 = vld [vmem:[#allocation7 + $0x5a0] sm:$0xff]
    %v304 = vld [vmem:[#allocation7 + $0x5a8] sm:$0xff]
    %v305 = vld [vmem:[#allocation7 + $0x5b0] sm:$0xff]
    %v306 = vld [vmem:[#allocation7 + $0x5b8] sm:$0xff]
    %v307 = vld [vmem:[#allocation7 + $0x5c0] sm:$0xff]
    %v308 = vld [vmem:[#allocation7 + $0x5c8] sm:$0xff]
    %v309 = vld [vmem:[#allocation7 + $0x5d0] sm:$0xff]
    %v310 = vld [vmem:[#allocation7 + $0x5d8] sm:$0xff]
    %v311 = vld [vmem:[#allocation7 + $0x5e0] sm:$0xff]
    %v312 = vld [vmem:[#allocation7 + $0x5e8] sm:$0xff]
    %v313 = vld [vmem:[#allocation7 + $0x5f0] sm:$0xff]
    %v314 = vld [vmem:[#allocation7 + $0x5f8] sm:$0xff]
    %v315 = vld [vmem:[#allocation7 + $0x600] sm:$0xff]
    %v316 = vld [vmem:[#allocation7 + $0x608] sm:$0xff]
    %v317 = vld [vmem:[#allocation7 + $0x610] sm:$0xff]
    %v318 = vld [vmem:[#allocation7 + $0x618] sm:$0xff]
    %v319 = vld [vmem:[#allocation7 + $0x620] sm:$0xff]
    %v320 = vld [vmem:[#allocation7 + $0x628] sm:$0xff]
    %v321 = vld [vmem:[#allocation7 + $0x630] sm:$0xff]
    %v322 = vld [vmem:[#allocation7 + $0x638] sm:$0xff]
    %v323 = vld [vmem:[#allocation7 + $0x640] sm:$0xff]
    %v324 = vld [vmem:[#allocation7 + $0x648] sm:$0xff]
    %v325 = vld [vmem:[#allocation7 + $0x650] sm:$0xff]
    %v326 = vld [vmem:[#allocation7 + $0x658] sm:$0xff]
    %v327 = vld [vmem:[#allocation7 + $0x660] sm:$0xff]
    %v328 = vld [vmem:[#allocation7 + $0x668] sm:$0xff]
    %v329 = vld [vmem:[#allocation7 + $0x670] sm:$0xff]
    %v330 = vld [vmem:[#allocation7 + $0x678] sm:$0xff]
    %v331 = vld [vmem:[#allocation7 + $0x680] sm:$0xff]
    %v332 = vld [vmem:[#allocation7 + $0x688] sm:$0xff]
    %v333 = vld [vmem:[#allocation7 + $0x690] sm:$0xff]
    %v334 = vld [vmem:[#allocation7 + $0x698] sm:$0xff]
    %v335 = vld [vmem:[#allocation7 + $0x6a0] sm:$0xff]
    %v336 = vld [vmem:[#allocation7 + $0x6a8] sm:$0xff]
    %v337 = vld [vmem:[#allocation7 + $0x6b0] sm:$0xff]
    %v338 = vld [vmem:[#allocation7 + $0x6b8] sm:$0xff]
    %v339 = vld [vmem:[#allocation7 + $0x6c0] sm:$0xff]
    %v340 = vld [vmem:[#allocation7 + $0x6c8] sm:$0xff]
    %v341 = vld [vmem:[#allocation7 + $0x6d0] sm:$0xff]
    %v342 = vld [vmem:[#allocation7 + $0x6d8] sm:$0xff]
    %v343 = vld [vmem:[#allocation7 + $0x6e0] sm:$0xff]
    %v344 = vld [vmem:[#allocation7 + $0x6e8] sm:$0xff]
    %v345 = vld [vmem:[#allocation7 + $0x6f0] sm:$0xff]
    %v346 = vld [vmem:[#allocation7 + $0x6f8] sm:$0xff]
    %v347 = vld [vmem:[#allocation7 + $0x700] sm:$0xff]
    %v348 = vld [vmem:[#allocation7 + $0x708] sm:$0xff]
    %v349 = vld [vmem:[#allocation7 + $0x710] sm:$0xff]
    %v350 = vld [vmem:[#allocation7 + $0x718] sm:$0xff]
    %v351 = vld [vmem:[#allocation7 + $0x720] sm:$0xff]
    %v352 = vld [vmem:[#allocation7 + $0x728] sm:$0xff]
    %v353 = vld [vmem:[#allocation7 + $0x730] sm:$0xff]
    %v354 = vld [vmem:[#allocation7 + $0x738] sm:$0xff]
    %v355 = vld [vmem:[#allocation7 + $0x740] sm:$0xff]
    %v356 = vld [vmem:[#allocation7 + $0x748] sm:$0xff]
    %v357 = vld [vmem:[#allocation7 + $0x750] sm:$0xff]
    %v358 = vld [vmem:[#allocation7 + $0x758] sm:$0xff]
    %v359 = vld [vmem:[#allocation7 + $0x760] sm:$0xff]
    %v360 = vld [vmem:[#allocation7 + $0x768] sm:$0xff]
    %v361 = vld [vmem:[#allocation7 + $0x770] sm:$0xff]
    %v362 = vld [vmem:[#allocation7 + $0x778] sm:$0xff]
    %v363 = vld [vmem:[#allocation7 + $0x780] sm:$0xff]
    %v364 = vld [vmem:[#allocation7 + $0x788] sm:$0xff]
    %v365 = vld [vmem:[#allocation7 + $0x790] sm:$0xff]
    %v366 = vld [vmem:[#allocation7 + $0x798] sm:$0xff]
    %v367 = vld [vmem:[#allocation7 + $0x7a0] sm:$0xff]
    %v368 = vld [vmem:[#allocation7 + $0x7a8] sm:$0xff]
    %v369 = vld [vmem:[#allocation7 + $0x7b0] sm:$0xff]
    %v370 = vld [vmem:[#allocation7 + $0x7b8] sm:$0xff]
    %v371 = vld [vmem:[#allocation7 + $0x7c0] sm:$0xff]
    %v372 = vld [vmem:[#allocation7 + $0x7c8] sm:$0xff]
    %v373 = vld [vmem:[#allocation7 + $0x7d0] sm:$0xff]
    %v374 = vld [vmem:[#allocation7 + $0x7d8] sm:$0xff]
    %v375 = vld [vmem:[#allocation7 + $0x7e0] sm:$0xff]
    %v376 = vld [vmem:[#allocation7 + $0x7e8] sm:$0xff]
    %v377 = vld [vmem:[#allocation7 + $0x7f0] sm:$0xff]
    %v378 = vld [vmem:[#allocation7 + $0x7f8] sm:$0xff]
    %v379 = vld [vmem:[#allocation7 + $0x800] sm:$0xff]
    %v380 = vld [vmem:[#allocation7 + $0x808] sm:$0xff]
    %v381 = vld [vmem:[#allocation7 + $0x810] sm:$0xff]
    %v382 = vld [vmem:[#allocation7 + $0x818] sm:$0xff]
    %v383 = vld [vmem:[#allocation7 + $0x820] sm:$0xff]
    %v384 = vld [vmem:[#allocation7 + $0x828] sm:$0xff]
    %v385 = vld [vmem:[#allocation7 + $0x830] sm:$0xff]
    %v386 = vld [vmem:[#allocation7 + $0x838] sm:$0xff]
    %v387 = vld [vmem:[#allocation7 + $0x840] sm:$0xff]
    %v388 = vld [vmem:[#allocation7 + $0x848] sm:$0xff]
    %v389 = vld [vmem:[#allocation7 + $0x850] sm:$0xff]
    %v390 = vld [vmem:[#allocation7 + $0x858] sm:$0xff]
    %v391 = vld [vmem:[#allocation7 + $0x860] sm:$0xff]
    %v392 = vld [vmem:[#allocation7 + $0x868] sm:$0xff]
    %v393 = vld [vmem:[#allocation7 + $0x870] sm:$0xff]
    %v394 = vld [vmem:[#allocation7 + $0x878] sm:$0xff]
    %v395 = vld [vmem:[#allocation7 + $0x880] sm:$0xff]
    %v396 = vld [vmem:[#allocation7 + $0x888] sm:$0xff]
    %v397 = vld [vmem:[#allocation7 + $0x890] sm:$0xff]
    %v398 = vld [vmem:[#allocation7 + $0x898] sm:$0xff]
    %v399 = vld [vmem:[#allocation7 + $0x8a0] sm:$0xff]
    %v400 = vld [vmem:[#allocation7 + $0x8a8] sm:$0xff]
    %v401 = vld [vmem:[#allocation7 + $0x8b0] sm:$0xff]
    %v402 = vld [vmem:[#allocation7 + $0x8b8] sm:$0xff]
    %v403 = vld [vmem:[#allocation7 + $0x8c0] sm:$0xff]
    %v404 = vld [vmem:[#allocation7 + $0x8c8] sm:$0xff]
    %v405 = vld [vmem:[#allocation7 + $0x8d0] sm:$0xff]
    %v406 = vld [vmem:[#allocation7 + $0x8d8] sm:$0xff]
    %v407 = vld [vmem:[#allocation7 + $0x8e0] sm:$0xff]
    %v408 = vld [vmem:[#allocation7 + $0x8e8] sm:$0xff]
    %v409 = vld [vmem:[#allocation7 + $0x8f0] sm:$0xff]
    %v410 = vld [vmem:[#allocation7 + $0x8f8] sm:$0xff]
    %v411 = vld [vmem:[#allocation9] sm:$0x3f]
    %v413 = vlaneseq
    %v414 = vshrl.u32 %v413, 7
    %v415 = vsub.s32 0, %v414
    %v416 = vrot.slane %v411, %v415
    %v417 = vlaneseq
    %v418 = vshrl.u32 %v417, 7
    %v419 = vsub.s32 1, %v418
    %v420 = vrot.slane %v411, %v419
    %v421 = vlaneseq
    %v422 = vshrl.u32 %v421, 7
    %v423 = vsub.s32 2, %v422
    %v424 = vrot.slane %v411, %v423
    %v425 = vlaneseq
    %v426 = vshrl.u32 %v425, 7
    %v427 = vsub.s32 3, %v426
    %v428 = vrot.slane %v411, %v427
    %v429 = vlaneseq
    %v430 = vshrl.u32 %v429, 7
    %v431 = vsub.s32 4, %v430
    %v432 = vrot.slane %v411, %v431
    %v433 = vlaneseq
    %v434 = vshrl.u32 %v433, 7
    %v435 = vsub.s32 5, %v434
    %v436 = vrot.slane %v411, %v435
    %v731 = vunpack.c.l.b16 %v123
    %v732 = vunpack.c.h.b16 %v123
    %v733 = vunpack.c.l.b16 %v124
    %v734 = vunpack.c.h.b16 %v124
    %v735 = vunpack.c.l.b16 %v125
    %v736 = vunpack.c.h.b16 %v125
    %v737 = vunpack.c.l.b16 %v126
    %v738 = vunpack.c.h.b16 %v126
    %v739 = vunpack.c.l.b16 %v127
    %v740 = vunpack.c.h.b16 %v127
    %v741 = vunpack.c.l.b16 %v128
    %v742 = vunpack.c.h.b16 %v128
    %v743 = vunpack.c.l.b16 %v129
    %v744 = vunpack.c.h.b16 %v129
    %v745 = vunpack.c.l.b16 %v130
    %v746 = vunpack.c.h.b16 %v130
    %v747 = vunpack.c.l.b16 %v131
    %v748 = vunpack.c.h.b16 %v131
    %v749 = vunpack.c.l.b16 %v132
    %v750 = vunpack.c.h.b16 %v132
    %v751 = vunpack.c.l.b16 %v133
    %v752 = vunpack.c.h.b16 %v133
    %v753 = vunpack.c.l.b16 %v134
    %v754 = vunpack.c.h.b16 %v134
    %v755 = vunpack.c.l.b16 %v135
    %v756 = vunpack.c.h.b16 %v135
    %v757 = vunpack.c.l.b16 %v136
    %v758 = vunpack.c.h.b16 %v136
    %v759 = vunpack.c.l.b16 %v137
    %v760 = vunpack.c.h.b16 %v137
    %v761 = vunpack.c.l.b16 %v138
    %v762 = vunpack.c.h.b16 %v138
    %v763 = vunpack.c.l.b16 %v139
    %v764 = vunpack.c.h.b16 %v139
    %v765 = vunpack.c.l.b16 %v140
    %v766 = vunpack.c.h.b16 %v140
    %v767 = vunpack.c.l.b16 %v141
    %v768 = vunpack.c.h.b16 %v141
    %v769 = vunpack.c.l.b16 %v142
    %v770 = vunpack.c.h.b16 %v142
    %v771 = vunpack.c.l.b16 %v143
    %v772 = vunpack.c.h.b16 %v143
    %v773 = vunpack.c.l.b16 %v144
    %v774 = vunpack.c.h.b16 %v144
    %v775 = vunpack.c.l.b16 %v145
    %v776 = vunpack.c.h.b16 %v145
    %v777 = vunpack.c.l.b16 %v146
    %v778 = vunpack.c.h.b16 %v146
    %v779 = vunpack.c.l.b16 %v147
    %v780 = vunpack.c.h.b16 %v147
    %v781 = vunpack.c.l.b16 %v148
    %v782 = vunpack.c.h.b16 %v148
    %v783 = vunpack.c.l.b16 %v149
    %v784 = vunpack.c.h.b16 %v149
    %v785 = vunpack.c.l.b16 %v150
    %v786 = vunpack.c.h.b16 %v150
    %v787 = vunpack.c.l.b16 %v151
    %v788 = vunpack.c.h.b16 %v151
    %v789 = vunpack.c.l.b16 %v152
    %v790 = vunpack.c.h.b16 %v152
    %v791 = vunpack.c.l.b16 %v153
    %v792 = vunpack.c.h.b16 %v153
    %v793 = vunpack.c.l.b16 %v154
    %v794 = vunpack.c.h.b16 %v154
    %v795 = vunpack.c.l.b16 %v155
    %v796 = vunpack.c.h.b16 %v155
    %v797 = vunpack.c.l.b16 %v156
    %v798 = vunpack.c.h.b16 %v156
    %v799 = vunpack.c.l.b16 %v157
    %v800 = vunpack.c.h.b16 %v157
    %v801 = vunpack.c.l.b16 %v158
    %v802 = vunpack.c.h.b16 %v158
    %v803 = vunpack.c.l.b16 %v159
    %v804 = vunpack.c.h.b16 %v159
    %v805 = vunpack.c.l.b16 %v160
    %v806 = vunpack.c.h.b16 %v160
    %v807 = vunpack.c.l.b16 %v161
    %v808 = vunpack.c.h.b16 %v161
    %v809 = vunpack.c.l.b16 %v162
    %v810 = vunpack.c.h.b16 %v162
    %v811 = vunpack.c.l.b16 %v163
    %v812 = vunpack.c.h.b16 %v163
    %v813 = vunpack.c.l.b16 %v164
    %v814 = vunpack.c.h.b16 %v164
    %v815 = vunpack.c.l.b16 %v165
    %v816 = vunpack.c.h.b16 %v165
    %v817 = vunpack.c.l.b16 %v166
    %v818 = vunpack.c.h.b16 %v166
    %v819 = vunpack.c.l.b16 %v167
    %v820 = vunpack.c.h.b16 %v167
    %v821 = vunpack.c.l.b16 %v168
    %v822 = vunpack.c.h.b16 %v168
    %v823 = vunpack.c.l.b16 %v169
    %v824 = vunpack.c.h.b16 %v169
    %v825 = vunpack.c.l.b16 %v170
    %v826 = vunpack.c.h.b16 %v170
    %v827 = vunpack.c.l.b16 %v171
    %v828 = vunpack.c.h.b16 %v171
    %v829 = vunpack.c.l.b16 %v172
    %v830 = vunpack.c.h.b16 %v172
    %v831 = vunpack.c.l.b16 %v173
    %v832 = vunpack.c.h.b16 %v173
    %v833 = vunpack.c.l.b16 %v174
    %v834 = vunpack.c.h.b16 %v174
    %v835 = vunpack.c.l.b16 %v175
    %v836 = vunpack.c.h.b16 %v175
    %v837 = vunpack.c.l.b16 %v176
    %v838 = vunpack.c.h.b16 %v176
    %v839 = vunpack.c.l.b16 %v177
    %v840 = vunpack.c.h.b16 %v177
    %v841 = vunpack.c.l.b16 %v178
    %v842 = vunpack.c.h.b16 %v178
    %v843 = vunpack.c.l.b16 %v179
    %v844 = vunpack.c.h.b16 %v179
    %v845 = vunpack.c.l.b16 %v180
    %v846 = vunpack.c.h.b16 %v180
    %v847 = vunpack.c.l.b16 %v181
    %v848 = vunpack.c.h.b16 %v181
    %v849 = vunpack.c.l.b16 %v182
    %v850 = vunpack.c.h.b16 %v182
    %v851 = vunpack.c.l.b16 %v183
    %v852 = vunpack.c.h.b16 %v183
    %v853 = vunpack.c.l.b16 %v184
    %v854 = vunpack.c.h.b16 %v184
    %v855 = vunpack.c.l.b16 %v185
    %v856 = vunpack.c.h.b16 %v185
    %v857 = vunpack.c.l.b16 %v186
    %v858 = vunpack.c.h.b16 %v186
    %v859 = vunpack.c.l.b16 %v187
    %v860 = vunpack.c.h.b16 %v187
    %v861 = vunpack.c.l.b16 %v188
    %v862 = vunpack.c.h.b16 %v188
    %v863 = vunpack.c.l.b16 %v189
    %v864 = vunpack.c.h.b16 %v189
    %v865 = vunpack.c.l.b16 %v190
    %v866 = vunpack.c.h.b16 %v190
    %v867 = vunpack.c.l.b16 %v191
    %v868 = vunpack.c.h.b16 %v191
    %v869 = vunpack.c.l.b16 %v192
    %v870 = vunpack.c.h.b16 %v192
    %v871 = vunpack.c.l.b16 %v193
    %v872 = vunpack.c.h.b16 %v193
    %v873 = vunpack.c.l.b16 %v194
    %v874 = vunpack.c.h.b16 %v194
    %v875 = vunpack.c.l.b16 %v195
    %v876 = vunpack.c.h.b16 %v195
    %v877 = vunpack.c.l.b16 %v196
    %v878 = vunpack.c.h.b16 %v196
    %v879 = vunpack.c.l.b16 %v197
    %v880 = vunpack.c.h.b16 %v197
    %v881 = vunpack.c.l.b16 %v198
    %v882 = vunpack.c.h.b16 %v198
    %v883 = vunpack.c.l.b16 %v199
    %v884 = vunpack.c.h.b16 %v199
    %v885 = vunpack.c.l.b16 %v200
    %v886 = vunpack.c.h.b16 %v200
    %v887 = vunpack.c.l.b16 %v201
    %v888 = vunpack.c.h.b16 %v201
    %v889 = vunpack.c.l.b16 %v202
    %v890 = vunpack.c.h.b16 %v202
    %v891 = vunpack.c.l.b16 %v203
    %v892 = vunpack.c.h.b16 %v203
    %v893 = vunpack.c.l.b16 %v204
    %v894 = vunpack.c.h.b16 %v204
    %v895 = vunpack.c.l.b16 %v205
    %v896 = vunpack.c.h.b16 %v205
    %v897 = vunpack.c.l.b16 %v206
    %v898 = vunpack.c.h.b16 %v206
    %v899 = vunpack.c.l.b16 %v207
    %v900 = vunpack.c.h.b16 %v207
    %v901 = vunpack.c.l.b16 %v208
    %v902 = vunpack.c.h.b16 %v208
    %v903 = vunpack.c.l.b16 %v209
    %v904 = vunpack.c.h.b16 %v209
    %v905 = vunpack.c.l.b16 %v210
    %v906 = vunpack.c.h.b16 %v210
    %v907 = vunpack.c.l.b16 %v211
    %v908 = vunpack.c.h.b16 %v211
    %v909 = vunpack.c.l.b16 %v212
    %v910 = vunpack.c.h.b16 %v212
    %v911 = vunpack.c.l.b16 %v213
    %v912 = vunpack.c.h.b16 %v213
    %v913 = vunpack.c.l.b16 %v214
    %v914 = vunpack.c.h.b16 %v214
    %v915 = vunpack.c.l.b16 %v215
    %v916 = vunpack.c.h.b16 %v215
    %v917 = vunpack.c.l.b16 %v216
    %v918 = vunpack.c.h.b16 %v216
    %v919 = vunpack.c.l.b16 %v217
    %v920 = vunpack.c.h.b16 %v217
    %v921 = vunpack.c.l.b16 %v218
    %v922 = vunpack.c.h.b16 %v218
    %v923 = vunpack.c.l.b16 %v219
    %v924 = vunpack.c.h.b16 %v219
    %v925 = vunpack.c.l.b16 %v220
    %v926 = vunpack.c.h.b16 %v220
    %v927 = vunpack.c.l.b16 %v221
    %v928 = vunpack.c.h.b16 %v221
    %v929 = vunpack.c.l.b16 %v222
    %v930 = vunpack.c.h.b16 %v222
    %v931 = vunpack.c.l.b16 %v223
    %v932 = vunpack.c.h.b16 %v223
    %v933 = vunpack.c.l.b16 %v224
    %v934 = vunpack.c.h.b16 %v224
    %v935 = vunpack.c.l.b16 %v225
    %v936 = vunpack.c.h.b16 %v225
    %v937 = vunpack.c.l.b16 %v226
    %v938 = vunpack.c.h.b16 %v226
    %v939 = vunpack.c.l.b16 %v227
    %v940 = vunpack.c.h.b16 %v227
    %v941 = vunpack.c.l.b16 %v228
    %v942 = vunpack.c.h.b16 %v228
    %v943 = vunpack.c.l.b16 %v229
    %v944 = vunpack.c.h.b16 %v229
    %v945 = vunpack.c.l.b16 %v230
    %v946 = vunpack.c.h.b16 %v230
    %v947 = vunpack.c.l.b16 %v231
    %v948 = vunpack.c.h.b16 %v231
    %v949 = vunpack.c.l.b16 %v232
    %v950 = vunpack.c.h.b16 %v232
    %v951 = vunpack.c.l.b16 %v233
    %v952 = vunpack.c.h.b16 %v233
    %v953 = vunpack.c.l.b16 %v234
    %v954 = vunpack.c.h.b16 %v234
    %v955 = vunpack.c.l.b16 %v235
    %v956 = vunpack.c.h.b16 %v235
    %v957 = vunpack.c.l.b16 %v236
    %v958 = vunpack.c.h.b16 %v236
    %v959 = vunpack.c.l.b16 %v237
    %v960 = vunpack.c.h.b16 %v237
    %v961 = vunpack.c.l.b16 %v238
    %v962 = vunpack.c.h.b16 %v238
    %v963 = vunpack.c.l.b16 %v239
    %v964 = vunpack.c.h.b16 %v239
    %v965 = vunpack.c.l.b16 %v240
    %v966 = vunpack.c.h.b16 %v240
    %v967 = vunpack.c.l.b16 %v241
    %v968 = vunpack.c.h.b16 %v241
    %v969 = vunpack.c.l.b16 %v242
    %v970 = vunpack.c.h.b16 %v242
    %v971 = vunpack.c.l.b16 %v243
    %v972 = vunpack.c.h.b16 %v243
    %v973 = vunpack.c.l.b16 %v244
    %v974 = vunpack.c.h.b16 %v244
    %v975 = vunpack.c.l.b16 %v245
    %v976 = vunpack.c.h.b16 %v245
    %v977 = vunpack.c.l.b16 %v246
    %v978 = vunpack.c.h.b16 %v246
    %v979 = vunpack.c.l.b16 %v247
    %v980 = vunpack.c.h.b16 %v247
    %v981 = vunpack.c.l.b16 %v248
    %v982 = vunpack.c.h.b16 %v248
    %v983 = vunpack.c.l.b16 %v249
    %v984 = vunpack.c.h.b16 %v249
    %v985 = vunpack.c.l.b16 %v250
    %v986 = vunpack.c.h.b16 %v250
    %v987 = vunpack.c.l.b16 %v251
    %v988 = vunpack.c.h.b16 %v251
    %v989 = vunpack.c.l.b16 %v252
    %v990 = vunpack.c.h.b16 %v252
    %v991 = vunpack.c.l.b16 %v253
    %v992 = vunpack.c.h.b16 %v253
    %v993 = vunpack.c.l.b16 %v254
    %v994 = vunpack.c.h.b16 %v254
    %v995 = vunpack.c.l.b16 %v255
    %v996 = vunpack.c.h.b16 %v255
    %v997 = vunpack.c.l.b16 %v256
    %v998 = vunpack.c.h.b16 %v256
    %v999 = vunpack.c.l.b16 %v257
    %v1000 = vunpack.c.h.b16 %v257
    %v1001 = vunpack.c.l.b16 %v258
    %v1002 = vunpack.c.h.b16 %v258
    %v1003 = vunpack.c.l.b16 %v259
    %v1004 = vunpack.c.h.b16 %v259
    %v1005 = vunpack.c.l.b16 %v260
    %v1006 = vunpack.c.h.b16 %v260
    %v1007 = vunpack.c.l.b16 %v261
    %v1008 = vunpack.c.h.b16 %v261
    %v1009 = vunpack.c.l.b16 %v262
    %v1010 = vunpack.c.h.b16 %v262
    %v1011 = vunpack.c.l.b16 %v263
    %v1012 = vunpack.c.h.b16 %v263
    %v1013 = vunpack.c.l.b16 %v264
    %v1014 = vunpack.c.h.b16 %v264
    %v1015 = vunpack.c.l.b16 %v265
    %v1016 = vunpack.c.h.b16 %v265
    %v1017 = vunpack.c.l.b16 %v266
    %v1018 = vunpack.c.h.b16 %v266
    %v1019 = vunpack.c.l.b16 %v267
    %v1020 = vunpack.c.h.b16 %v267
    %v1021 = vunpack.c.l.b16 %v268
    %v1022 = vunpack.c.h.b16 %v268
    %v1023 = vunpack.c.l.b16 %v269
    %v1024 = vunpack.c.h.b16 %v269
    %v1025 = vunpack.c.l.b16 %v270
    %v1026 = vunpack.c.h.b16 %v270
    %v1027 = vunpack.c.l.b16 %v271
    %v1028 = vunpack.c.h.b16 %v271
    %v1029 = vunpack.c.l.b16 %v272
    %v1030 = vunpack.c.h.b16 %v272
    %v1031 = vunpack.c.l.b16 %v273
    %v1032 = vunpack.c.h.b16 %v273
    %v1033 = vunpack.c.l.b16 %v274
    %v1034 = vunpack.c.h.b16 %v274
    %v1035 = vunpack.c.l.b16 %v275
    %v1036 = vunpack.c.h.b16 %v275
    %v1037 = vunpack.c.l.b16 %v276
    %v1038 = vunpack.c.h.b16 %v276
    %v1039 = vunpack.c.l.b16 %v277
    %v1040 = vunpack.c.h.b16 %v277
    %v1041 = vunpack.c.l.b16 %v278
    %v1042 = vunpack.c.h.b16 %v278
    %v1043 = vunpack.c.l.b16 %v279
    %v1044 = vunpack.c.h.b16 %v279
    %v1045 = vunpack.c.l.b16 %v280
    %v1046 = vunpack.c.h.b16 %v280
    %v1047 = vunpack.c.l.b16 %v281
    %v1048 = vunpack.c.h.b16 %v281
    %v1049 = vunpack.c.l.b16 %v282
    %v1050 = vunpack.c.h.b16 %v282
    %v1051 = vunpack.c.l.b16 %v283
    %v1052 = vunpack.c.h.b16 %v283
    %v1053 = vunpack.c.l.b16 %v284
    %v1054 = vunpack.c.h.b16 %v284
    %v1055 = vunpack.c.l.b16 %v285
    %v1056 = vunpack.c.h.b16 %v285
    %v1057 = vunpack.c.l.b16 %v286
    %v1058 = vunpack.c.h.b16 %v286
    %v1059 = vunpack.c.l.b16 %v287
    %v1060 = vunpack.c.h.b16 %v287
    %v1061 = vunpack.c.l.b16 %v288
    %v1062 = vunpack.c.h.b16 %v288
    %v1063 = vunpack.c.l.b16 %v289
    %v1064 = vunpack.c.h.b16 %v289
    %v1065 = vunpack.c.l.b16 %v290
    %v1066 = vunpack.c.h.b16 %v290
    %v1067 = vunpack.c.l.b16 %v291
    %v1068 = vunpack.c.h.b16 %v291
    %v1069 = vunpack.c.l.b16 %v292
    %v1070 = vunpack.c.h.b16 %v292
    %v1071 = vunpack.c.l.b16 %v293
    %v1072 = vunpack.c.h.b16 %v293
    %v1073 = vunpack.c.l.b16 %v294
    %v1074 = vunpack.c.h.b16 %v294
    %v1075 = vunpack.c.l.b16 %v295
    %v1076 = vunpack.c.h.b16 %v295
    %v1077 = vunpack.c.l.b16 %v296
    %v1078 = vunpack.c.h.b16 %v296
    %v1079 = vunpack.c.l.b16 %v297
    %v1080 = vunpack.c.h.b16 %v297
    %v1081 = vunpack.c.l.b16 %v298
    %v1082 = vunpack.c.h.b16 %v298
    %v1083 = vunpack.c.l.b16 %v299
    %v1084 = vunpack.c.h.b16 %v299
    %v1085 = vunpack.c.l.b16 %v300
    %v1086 = vunpack.c.h.b16 %v300
    %v1087 = vunpack.c.l.b16 %v301
    %v1088 = vunpack.c.h.b16 %v301
    %v1089 = vunpack.c.l.b16 %v302
    %v1090 = vunpack.c.h.b16 %v302
    %v1091 = vunpack.c.l.b16 %v303
    %v1092 = vunpack.c.h.b16 %v303
    %v1093 = vunpack.c.l.b16 %v304
    %v1094 = vunpack.c.h.b16 %v304
    %v1095 = vunpack.c.l.b16 %v305
    %v1096 = vunpack.c.h.b16 %v305
    %v1097 = vunpack.c.l.b16 %v306
    %v1098 = vunpack.c.h.b16 %v306
    %v1099 = vunpack.c.l.b16 %v307
    %v1100 = vunpack.c.h.b16 %v307
    %v1101 = vunpack.c.l.b16 %v308
    %v1102 = vunpack.c.h.b16 %v308
    %v1103 = vunpack.c.l.b16 %v309
    %v1104 = vunpack.c.h.b16 %v309
    %v1105 = vunpack.c.l.b16 %v310
    %v1106 = vunpack.c.h.b16 %v310
    %v1107 = vunpack.c.l.b16 %v311
    %v1108 = vunpack.c.h.b16 %v311
    %v1109 = vunpack.c.l.b16 %v312
    %v1110 = vunpack.c.h.b16 %v312
    %v1111 = vunpack.c.l.b16 %v313
    %v1112 = vunpack.c.h.b16 %v313
    %v1113 = vunpack.c.l.b16 %v314
    %v1114 = vunpack.c.h.b16 %v314
    %v1115 = vunpack.c.l.b16 %v315
    %v1116 = vunpack.c.h.b16 %v315
    %v1117 = vunpack.c.l.b16 %v316
    %v1118 = vunpack.c.h.b16 %v316
    %v1119 = vunpack.c.l.b16 %v317
    %v1120 = vunpack.c.h.b16 %v317
    %v1121 = vunpack.c.l.b16 %v318
    %v1122 = vunpack.c.h.b16 %v318
    %v1123 = vunpack.c.l.b16 %v319
    %v1124 = vunpack.c.h.b16 %v319
    %v1125 = vunpack.c.l.b16 %v320
    %v1126 = vunpack.c.h.b16 %v320
    %v1127 = vunpack.c.l.b16 %v321
    %v1128 = vunpack.c.h.b16 %v321
    %v1129 = vunpack.c.l.b16 %v322
    %v1130 = vunpack.c.h.b16 %v322
    %v1131 = vunpack.c.l.b16 %v323
    %v1132 = vunpack.c.h.b16 %v323
    %v1133 = vunpack.c.l.b16 %v324
    %v1134 = vunpack.c.h.b16 %v324
    %v1135 = vunpack.c.l.b16 %v325
    %v1136 = vunpack.c.h.b16 %v325
    %v1137 = vunpack.c.l.b16 %v326
    %v1138 = vunpack.c.h.b16 %v326
    %v1139 = vunpack.c.l.b16 %v327
    %v1140 = vunpack.c.h.b16 %v327
    %v1141 = vunpack.c.l.b16 %v328
    %v1142 = vunpack.c.h.b16 %v328
    %v1143 = vunpack.c.l.b16 %v329
    %v1144 = vunpack.c.h.b16 %v329
    %v1145 = vunpack.c.l.b16 %v330
    %v1146 = vunpack.c.h.b16 %v330
    %v1147 = vunpack.c.l.b16 %v331
    %v1148 = vunpack.c.h.b16 %v331
    %v1149 = vunpack.c.l.b16 %v332
    %v1150 = vunpack.c.h.b16 %v332
    %v1151 = vunpack.c.l.b16 %v333
    %v1152 = vunpack.c.h.b16 %v333
    %v1153 = vunpack.c.l.b16 %v334
    %v1154 = vunpack.c.h.b16 %v334
    %v1155 = vunpack.c.l.b16 %v335
    %v1156 = vunpack.c.h.b16 %v335
    %v1157 = vunpack.c.l.b16 %v336
    %v1158 = vunpack.c.h.b16 %v336
    %v1159 = vunpack.c.l.b16 %v337
    %v1160 = vunpack.c.h.b16 %v337
    %v1161 = vunpack.c.l.b16 %v338
    %v1162 = vunpack.c.h.b16 %v338
    %v1163 = vunpack.c.l.b16 %v339
    %v1164 = vunpack.c.h.b16 %v339
    %v1165 = vunpack.c.l.b16 %v340
    %v1166 = vunpack.c.h.b16 %v340
    %v1167 = vunpack.c.l.b16 %v341
    %v1168 = vunpack.c.h.b16 %v341
    %v1169 = vunpack.c.l.b16 %v342
    %v1170 = vunpack.c.h.b16 %v342
    %v1171 = vunpack.c.l.b16 %v343
    %v1172 = vunpack.c.h.b16 %v343
    %v1173 = vunpack.c.l.b16 %v344
    %v1174 = vunpack.c.h.b16 %v344
    %v1175 = vunpack.c.l.b16 %v345
    %v1176 = vunpack.c.h.b16 %v345
    %v1177 = vunpack.c.l.b16 %v346
    %v1178 = vunpack.c.h.b16 %v346
    %v1179 = vunpack.c.l.b16 %v347
    %v1180 = vunpack.c.h.b16 %v347
    %v1181 = vunpack.c.l.b16 %v348
    %v1182 = vunpack.c.h.b16 %v348
    %v1183 = vunpack.c.l.b16 %v349
    %v1184 = vunpack.c.h.b16 %v349
    %v1185 = vunpack.c.l.b16 %v350
    %v1186 = vunpack.c.h.b16 %v350
    %v1187 = vunpack.c.l.b16 %v351
    %v1188 = vunpack.c.h.b16 %v351
    %v1189 = vunpack.c.l.b16 %v352
    %v1190 = vunpack.c.h.b16 %v352
    %v1191 = vunpack.c.l.b16 %v353
    %v1192 = vunpack.c.h.b16 %v353
    %v1193 = vunpack.c.l.b16 %v354
    %v1194 = vunpack.c.h.b16 %v354
    %v1195 = vunpack.c.l.b16 %v355
    %v1196 = vunpack.c.h.b16 %v355
    %v1197 = vunpack.c.l.b16 %v356
    %v1198 = vunpack.c.h.b16 %v356
    %v1199 = vunpack.c.l.b16 %v357
    %v1200 = vunpack.c.h.b16 %v357
    %v1201 = vunpack.c.l.b16 %v358
    %v1202 = vunpack.c.h.b16 %v358
    %v1203 = vunpack.c.l.b16 %v359
    %v1204 = vunpack.c.h.b16 %v359
    %v1205 = vunpack.c.l.b16 %v360
    %v1206 = vunpack.c.h.b16 %v360
    %v1207 = vunpack.c.l.b16 %v361
    %v1208 = vunpack.c.h.b16 %v361
    %v1209 = vunpack.c.l.b16 %v362
    %v1210 = vunpack.c.h.b16 %v362
    %v1211 = vunpack.c.l.b16 %v363
    %v1212 = vunpack.c.h.b16 %v363
    %v1213 = vunpack.c.l.b16 %v364
    %v1214 = vunpack.c.h.b16 %v364
    %v1215 = vunpack.c.l.b16 %v365
    %v1216 = vunpack.c.h.b16 %v365
    %v1217 = vunpack.c.l.b16 %v366
    %v1218 = vunpack.c.h.b16 %v366
    %v1219 = vunpack.c.l.b16 %v367
    %v1220 = vunpack.c.h.b16 %v367
    %v1221 = vunpack.c.l.b16 %v368
    %v1222 = vunpack.c.h.b16 %v368
    %v1223 = vunpack.c.l.b16 %v369
    %v1224 = vunpack.c.h.b16 %v369
    %v1225 = vunpack.c.l.b16 %v370
    %v1226 = vunpack.c.h.b16 %v370
    %v1227 = vunpack.c.l.b16 %v371
    %v1228 = vunpack.c.h.b16 %v371
    %v1229 = vunpack.c.l.b16 %v372
    %v1230 = vunpack.c.h.b16 %v372
    %v1231 = vunpack.c.l.b16 %v373
    %v1232 = vunpack.c.h.b16 %v373
    %v1233 = vunpack.c.l.b16 %v374
    %v1234 = vunpack.c.h.b16 %v374
    %v1235 = vunpack.c.l.b16 %v375
    %v1236 = vunpack.c.h.b16 %v375
    %v1237 = vunpack.c.l.b16 %v376
    %v1238 = vunpack.c.h.b16 %v376
    %v1239 = vunpack.c.l.b16 %v377
    %v1240 = vunpack.c.h.b16 %v377
    %v1241 = vunpack.c.l.b16 %v378
    %v1242 = vunpack.c.h.b16 %v378
    %v1243 = vunpack.c.l.b16 %v379
    %v1244 = vunpack.c.h.b16 %v379
    %v1245 = vunpack.c.l.b16 %v380
    %v1246 = vunpack.c.h.b16 %v380
    %v1247 = vunpack.c.l.b16 %v381
    %v1248 = vunpack.c.h.b16 %v381
    %v1249 = vunpack.c.l.b16 %v382
    %v1250 = vunpack.c.h.b16 %v382
    %v1251 = vunpack.c.l.b16 %v383
    %v1252 = vunpack.c.h.b16 %v383
    %v1253 = vunpack.c.l.b16 %v384
    %v1254 = vunpack.c.h.b16 %v384
    %v1255 = vunpack.c.l.b16 %v385
    %v1256 = vunpack.c.h.b16 %v385
    %v1257 = vunpack.c.l.b16 %v386
    %v1258 = vunpack.c.h.b16 %v386
    %v1259 = vunpack.c.l.b16 %v387
    %v1260 = vunpack.c.h.b16 %v387
    %v1261 = vunpack.c.l.b16 %v388
    %v1262 = vunpack.c.h.b16 %v388
    %v1263 = vunpack.c.l.b16 %v389
    %v1264 = vunpack.c.h.b16 %v389
    %v1265 = vunpack.c.l.b16 %v390
    %v1266 = vunpack.c.h.b16 %v390
    %v1267 = vunpack.c.l.b16 %v391
    %v1268 = vunpack.c.h.b16 %v391
    %v1269 = vunpack.c.l.b16 %v392
    %v1270 = vunpack.c.h.b16 %v392
    %v1271 = vunpack.c.l.b16 %v393
    %v1272 = vunpack.c.h.b16 %v393
    %v1273 = vunpack.c.l.b16 %v394
    %v1274 = vunpack.c.h.b16 %v394
    %v1275 = vunpack.c.l.b16 %v395
    %v1276 = vunpack.c.h.b16 %v395
    %v1277 = vunpack.c.l.b16 %v396
    %v1278 = vunpack.c.h.b16 %v396
    %v1279 = vunpack.c.l.b16 %v397
    %v1280 = vunpack.c.h.b16 %v397
    %v1281 = vunpack.c.l.b16 %v398
    %v1282 = vunpack.c.h.b16 %v398
    %v1283 = vunpack.c.l.b16 %v399
    %v1284 = vunpack.c.h.b16 %v399
    %v1285 = vunpack.c.l.b16 %v400
    %v1286 = vunpack.c.h.b16 %v400
    %v1287 = vunpack.c.l.b16 %v401
    %v1288 = vunpack.c.h.b16 %v401
    %v1289 = vunpack.c.l.b16 %v402
    %v1290 = vunpack.c.h.b16 %v402
    %v1291 = vunpack.c.l.b16 %v403
    %v1292 = vunpack.c.h.b16 %v403
    %v1293 = vunpack.c.l.b16 %v404
    %v1294 = vunpack.c.h.b16 %v404
    %v1295 = vunpack.c.l.b16 %v405
    %v1296 = vunpack.c.h.b16 %v405
    %v1297 = vunpack.c.l.b16 %v406
    %v1298 = vunpack.c.h.b16 %v406
    %v1299 = vunpack.c.l.b16 %v407
    %v1300 = vunpack.c.h.b16 %v407
    %v1301 = vunpack.c.l.b16 %v408
    %v1302 = vunpack.c.h.b16 %v408
    %v1303 = vunpack.c.l.b16 %v409
    %v1304 = vunpack.c.h.b16 %v409
    %v1305 = vunpack.c.l.b16 %v410
    %v1306 = vunpack.c.h.b16 %v410
    %v1307 = vpack.c.b16 %v737, %v731
    %v1308 = vpack.c.b16 %v738, %v732
    %v1309 = vpack.c.b16 %v739, %v733
    %v1310 = vpack.c.b16 %v740, %v734
    %v1311 = vpack.c.b16 %v741, %v735
    %v1312 = vpack.c.b16 %v742, %v736
    %v1313 = vpack.c.b16 %v749, %v743
    %v1314 = vpack.c.b16 %v750, %v744
    %v1315 = vpack.c.b16 %v751, %v745
    %v1316 = vpack.c.b16 %v752, %v746
    %v1317 = vpack.c.b16 %v753, %v747
    %v1318 = vpack.c.b16 %v754, %v748
    %v1319 = vpack.c.b16 %v761, %v755
    %v1320 = vpack.c.b16 %v762, %v756
    %v1321 = vpack.c.b16 %v763, %v757
    %v1322 = vpack.c.b16 %v764, %v758
    %v1323 = vpack.c.b16 %v765, %v759
    %v1324 = vpack.c.b16 %v766, %v760
    %v1325 = vpack.c.b16 %v773, %v767
    %v1326 = vpack.c.b16 %v774, %v768
    %v1327 = vpack.c.b16 %v775, %v769
    %v1328 = vpack.c.b16 %v776, %v770
    %v1329 = vpack.c.b16 %v777, %v771
    %v1330 = vpack.c.b16 %v778, %v772
    %v1331 = vpack.c.b16 %v785, %v779
    %v1332 = vpack.c.b16 %v786, %v780
    %v1333 = vpack.c.b16 %v787, %v781
    %v1334 = vpack.c.b16 %v788, %v782
    %v1335 = vpack.c.b16 %v789, %v783
    %v1336 = vpack.c.b16 %v790, %v784
    %v1337 = vpack.c.b16 %v797, %v791
    %v1338 = vpack.c.b16 %v798, %v792
    %v1339 = vpack.c.b16 %v799, %v793
    %v1340 = vpack.c.b16 %v800, %v794
    %v1341 = vpack.c.b16 %v801, %v795
    %v1342 = vpack.c.b16 %v802, %v796
    %v1343 = vpack.c.b16 %v809, %v803
    %v1344 = vpack.c.b16 %v810, %v804
    %v1345 = vpack.c.b16 %v811, %v805
    %v1346 = vpack.c.b16 %v812, %v806
    %v1347 = vpack.c.b16 %v813, %v807
    %v1348 = vpack.c.b16 %v814, %v808
    %v1349 = vpack.c.b16 %v821, %v815
    %v1350 = vpack.c.b16 %v822, %v816
    %v1351 = vpack.c.b16 %v823, %v817
    %v1352 = vpack.c.b16 %v824, %v818
    %v1353 = vpack.c.b16 %v825, %v819
    %v1354 = vpack.c.b16 %v826, %v820
    %v1355 = vpack.c.b16 %v833, %v827
    %v1356 = vpack.c.b16 %v834, %v828
    %v1357 = vpack.c.b16 %v835, %v829
    %v1358 = vpack.c.b16 %v836, %v830
    %v1359 = vpack.c.b16 %v837, %v831
    %v1360 = vpack.c.b16 %v838, %v832
    %v1361 = vpack.c.b16 %v845, %v839
    %v1362 = vpack.c.b16 %v846, %v840
    %v1363 = vpack.c.b16 %v847, %v841
    %v1364 = vpack.c.b16 %v848, %v842
    %v1365 = vpack.c.b16 %v849, %v843
    %v1366 = vpack.c.b16 %v850, %v844
    %v1367 = vpack.c.b16 %v857, %v851
    %v1368 = vpack.c.b16 %v858, %v852
    %v1369 = vpack.c.b16 %v859, %v853
    %v1370 = vpack.c.b16 %v860, %v854
    %v1371 = vpack.c.b16 %v861, %v855
    %v1372 = vpack.c.b16 %v862, %v856
    %v1373 = vpack.c.b16 %v869, %v863
    %v1374 = vpack.c.b16 %v870, %v864
    %v1375 = vpack.c.b16 %v871, %v865
    %v1376 = vpack.c.b16 %v872, %v866
    %v1377 = vpack.c.b16 %v873, %v867
    %v1378 = vpack.c.b16 %v874, %v868
    %v1379 = vpack.c.b16 %v881, %v875
    %v1380 = vpack.c.b16 %v882, %v876
    %v1381 = vpack.c.b16 %v883, %v877
    %v1382 = vpack.c.b16 %v884, %v878
    %v1383 = vpack.c.b16 %v885, %v879
    %v1384 = vpack.c.b16 %v886, %v880
    %v1385 = vpack.c.b16 %v893, %v887
    %v1386 = vpack.c.b16 %v894, %v888
    %v1387 = vpack.c.b16 %v895, %v889
    %v1388 = vpack.c.b16 %v896, %v890
    %v1389 = vpack.c.b16 %v897, %v891
    %v1390 = vpack.c.b16 %v898, %v892
    %v1391 = vpack.c.b16 %v905, %v899
    %v1392 = vpack.c.b16 %v906, %v900
    %v1393 = vpack.c.b16 %v907, %v901
    %v1394 = vpack.c.b16 %v908, %v902
    %v1395 = vpack.c.b16 %v909, %v903
    %v1396 = vpack.c.b16 %v910, %v904
    %v1397 = vpack.c.b16 %v917, %v911
    %v1398 = vpack.c.b16 %v918, %v912
    %v1399 = vpack.c.b16 %v919, %v913
    %v1400 = vpack.c.b16 %v920, %v914
    %v1401 = vpack.c.b16 %v921, %v915
    %v1402 = vpack.c.b16 %v922, %v916
    %v1403 = vpack.c.b16 %v929, %v923
    %v1404 = vpack.c.b16 %v930, %v924
    %v1405 = vpack.c.b16 %v931, %v925
    %v1406 = vpack.c.b16 %v932, %v926
    %v1407 = vpack.c.b16 %v933, %v927
    %v1408 = vpack.c.b16 %v934, %v928
    %v1409 = vpack.c.b16 %v941, %v935
    %v1410 = vpack.c.b16 %v942, %v936
    %v1411 = vpack.c.b16 %v943, %v937
    %v1412 = vpack.c.b16 %v944, %v938
    %v1413 = vpack.c.b16 %v945, %v939
    %v1414 = vpack.c.b16 %v946, %v940
    %v1415 = vpack.c.b16 %v953, %v947
    %v1416 = vpack.c.b16 %v954, %v948
    %v1417 = vpack.c.b16 %v955, %v949
    %v1418 = vpack.c.b16 %v956, %v950
    %v1419 = vpack.c.b16 %v957, %v951
    %v1420 = vpack.c.b16 %v958, %v952
    %v1421 = vpack.c.b16 %v965, %v959
    %v1422 = vpack.c.b16 %v966, %v960
    %v1423 = vpack.c.b16 %v967, %v961
    %v1424 = vpack.c.b16 %v968, %v962
    %v1425 = vpack.c.b16 %v969, %v963
    %v1426 = vpack.c.b16 %v970, %v964
    %v1427 = vpack.c.b16 %v977, %v971
    %v1428 = vpack.c.b16 %v978, %v972
    %v1429 = vpack.c.b16 %v979, %v973
    %v1430 = vpack.c.b16 %v980, %v974
    %v1431 = vpack.c.b16 %v981, %v975
    %v1432 = vpack.c.b16 %v982, %v976
    %v1433 = vpack.c.b16 %v989, %v983
    %v1434 = vpack.c.b16 %v990, %v984
    %v1435 = vpack.c.b16 %v991, %v985
    %v1436 = vpack.c.b16 %v992, %v986
    %v1437 = vpack.c.b16 %v993, %v987
    %v1438 = vpack.c.b16 %v994, %v988
    %v1439 = vpack.c.b16 %v1001, %v995
    %v1440 = vpack.c.b16 %v1002, %v996
    %v1441 = vpack.c.b16 %v1003, %v997
    %v1442 = vpack.c.b16 %v1004, %v998
    %v1443 = vpack.c.b16 %v1005, %v999
    %v1444 = vpack.c.b16 %v1006, %v1000
    %v1445 = vpack.c.b16 %v1013, %v1007
    %v1446 = vpack.c.b16 %v1014, %v1008
    %v1447 = vpack.c.b16 %v1015, %v1009
    %v1448 = vpack.c.b16 %v1016, %v1010
    %v1449 = vpack.c.b16 %v1017, %v1011
    %v1450 = vpack.c.b16 %v1018, %v1012
    %v1451 = vpack.c.b16 %v1025, %v1019
    %v1452 = vpack.c.b16 %v1026, %v1020
    %v1453 = vpack.c.b16 %v1027, %v1021
    %v1454 = vpack.c.b16 %v1028, %v1022
    %v1455 = vpack.c.b16 %v1029, %v1023
    %v1456 = vpack.c.b16 %v1030, %v1024
    %v1457 = vpack.c.b16 %v1037, %v1031
    %v1458 = vpack.c.b16 %v1038, %v1032
    %v1459 = vpack.c.b16 %v1039, %v1033
    %v1460 = vpack.c.b16 %v1040, %v1034
    %v1461 = vpack.c.b16 %v1041, %v1035
    %v1462 = vpack.c.b16 %v1042, %v1036
    %v1463 = vpack.c.b16 %v1049, %v1043
    %v1464 = vpack.c.b16 %v1050, %v1044
    %v1465 = vpack.c.b16 %v1051, %v1045
    %v1466 = vpack.c.b16 %v1052, %v1046
    %v1467 = vpack.c.b16 %v1053, %v1047
    %v1468 = vpack.c.b16 %v1054, %v1048
    %v1469 = vpack.c.b16 %v1061, %v1055
    %v1470 = vpack.c.b16 %v1062, %v1056
    %v1471 = vpack.c.b16 %v1063, %v1057
    %v1472 = vpack.c.b16 %v1064, %v1058
    %v1473 = vpack.c.b16 %v1065, %v1059
    %v1474 = vpack.c.b16 %v1066, %v1060
    %v1475 = vpack.c.b16 %v1073, %v1067
    %v1476 = vpack.c.b16 %v1074, %v1068
    %v1477 = vpack.c.b16 %v1075, %v1069
    %v1478 = vpack.c.b16 %v1076, %v1070
    %v1479 = vpack.c.b16 %v1077, %v1071
    %v1480 = vpack.c.b16 %v1078, %v1072
    %v1481 = vpack.c.b16 %v1085, %v1079
    %v1482 = vpack.c.b16 %v1086, %v1080
    %v1483 = vpack.c.b16 %v1087, %v1081
    %v1484 = vpack.c.b16 %v1088, %v1082
    %v1485 = vpack.c.b16 %v1089, %v1083
    %v1486 = vpack.c.b16 %v1090, %v1084
    %v1487 = vpack.c.b16 %v1097, %v1091
    %v1488 = vpack.c.b16 %v1098, %v1092
    %v1489 = vpack.c.b16 %v1099, %v1093
    %v1490 = vpack.c.b16 %v1100, %v1094
    %v1491 = vpack.c.b16 %v1101, %v1095
    %v1492 = vpack.c.b16 %v1102, %v1096
    %v1493 = vpack.c.b16 %v1109, %v1103
    %v1494 = vpack.c.b16 %v1110, %v1104
    %v1495 = vpack.c.b16 %v1111, %v1105
    %v1496 = vpack.c.b16 %v1112, %v1106
    %v1497 = vpack.c.b16 %v1113, %v1107
    %v1498 = vpack.c.b16 %v1114, %v1108
    %v1499 = vpack.c.b16 %v1121, %v1115
    %v1500 = vpack.c.b16 %v1122, %v1116
    %v1501 = vpack.c.b16 %v1123, %v1117
    %v1502 = vpack.c.b16 %v1124, %v1118
    %v1503 = vpack.c.b16 %v1125, %v1119
    %v1504 = vpack.c.b16 %v1126, %v1120
    %v1505 = vpack.c.b16 %v1133, %v1127
    %v1506 = vpack.c.b16 %v1134, %v1128
    %v1507 = vpack.c.b16 %v1135, %v1129
    %v1508 = vpack.c.b16 %v1136, %v1130
    %v1509 = vpack.c.b16 %v1137, %v1131
    %v1510 = vpack.c.b16 %v1138, %v1132
    %v1511 = vpack.c.b16 %v1145, %v1139
    %v1512 = vpack.c.b16 %v1146, %v1140
    %v1513 = vpack.c.b16 %v1147, %v1141
    %v1514 = vpack.c.b16 %v1148, %v1142
    %v1515 = vpack.c.b16 %v1149, %v1143
    %v1516 = vpack.c.b16 %v1150, %v1144
    %v1517 = vpack.c.b16 %v1157, %v1151
    %v1518 = vpack.c.b16 %v1158, %v1152
    %v1519 = vpack.c.b16 %v1159, %v1153
    %v1520 = vpack.c.b16 %v1160, %v1154
    %v1521 = vpack.c.b16 %v1161, %v1155
    %v1522 = vpack.c.b16 %v1162, %v1156
    %v1523 = vpack.c.b16 %v1169, %v1163
    %v1524 = vpack.c.b16 %v1170, %v1164
    %v1525 = vpack.c.b16 %v1171, %v1165
    %v1526 = vpack.c.b16 %v1172, %v1166
    %v1527 = vpack.c.b16 %v1173, %v1167
    %v1528 = vpack.c.b16 %v1174, %v1168
    %v1529 = vpack.c.b16 %v1181, %v1175
    %v1530 = vpack.c.b16 %v1182, %v1176
    %v1531 = vpack.c.b16 %v1183, %v1177
    %v1532 = vpack.c.b16 %v1184, %v1178
    %v1533 = vpack.c.b16 %v1185, %v1179
    %v1534 = vpack.c.b16 %v1186, %v1180
    %v1535 = vpack.c.b16 %v1193, %v1187
    %v1536 = vpack.c.b16 %v1194, %v1188
    %v1537 = vpack.c.b16 %v1195, %v1189
    %v1538 = vpack.c.b16 %v1196, %v1190
    %v1539 = vpack.c.b16 %v1197, %v1191
    %v1540 = vpack.c.b16 %v1198, %v1192
    %v1541 = vpack.c.b16 %v1205, %v1199
    %v1542 = vpack.c.b16 %v1206, %v1200
    %v1543 = vpack.c.b16 %v1207, %v1201
    %v1544 = vpack.c.b16 %v1208, %v1202
    %v1545 = vpack.c.b16 %v1209, %v1203
    %v1546 = vpack.c.b16 %v1210, %v1204
    %v1547 = vpack.c.b16 %v1217, %v1211
    %v1548 = vpack.c.b16 %v1218, %v1212
    %v1549 = vpack.c.b16 %v1219, %v1213
    %v1550 = vpack.c.b16 %v1220, %v1214
    %v1551 = vpack.c.b16 %v1221, %v1215
    %v1552 = vpack.c.b16 %v1222, %v1216
    %v1553 = vpack.c.b16 %v1229, %v1223
    %v1554 = vpack.c.b16 %v1230, %v1224
    %v1555 = vpack.c.b16 %v1231, %v1225
    %v1556 = vpack.c.b16 %v1232, %v1226
    %v1557 = vpack.c.b16 %v1233, %v1227
    %v1558 = vpack.c.b16 %v1234, %v1228
    %v1559 = vpack.c.b16 %v1241, %v1235
    %v1560 = vpack.c.b16 %v1242, %v1236
    %v1561 = vpack.c.b16 %v1243, %v1237
    %v1562 = vpack.c.b16 %v1244, %v1238
    %v1563 = vpack.c.b16 %v1245, %v1239
    %v1564 = vpack.c.b16 %v1246, %v1240
    %v1565 = vpack.c.b16 %v1253, %v1247
    %v1566 = vpack.c.b16 %v1254, %v1248
    %v1567 = vpack.c.b16 %v1255, %v1249
    %v1568 = vpack.c.b16 %v1256, %v1250
    %v1569 = vpack.c.b16 %v1257, %v1251
    %v1570 = vpack.c.b16 %v1258, %v1252
    %v1571 = vpack.c.b16 %v1265, %v1259
    %v1572 = vpack.c.b16 %v1266, %v1260
    %v1573 = vpack.c.b16 %v1267, %v1261
    %v1574 = vpack.c.b16 %v1268, %v1262
    %v1575 = vpack.c.b16 %v1269, %v1263
    %v1576 = vpack.c.b16 %v1270, %v1264
    %v1577 = vpack.c.b16 %v1277, %v1271
    %v1578 = vpack.c.b16 %v1278, %v1272
    %v1579 = vpack.c.b16 %v1279, %v1273
    %v1580 = vpack.c.b16 %v1280, %v1274
    %v1581 = vpack.c.b16 %v1281, %v1275
    %v1582 = vpack.c.b16 %v1282, %v1276
    %v1583 = vpack.c.b16 %v1289, %v1283
    %v1584 = vpack.c.b16 %v1290, %v1284
    %v1585 = vpack.c.b16 %v1291, %v1285
    %v1586 = vpack.c.b16 %v1292, %v1286
    %v1587 = vpack.c.b16 %v1293, %v1287
    %v1588 = vpack.c.b16 %v1294, %v1288
    %v1589 = vpack.c.b16 %v1301, %v1295
    %v1590 = vpack.c.b16 %v1302, %v1296
    %v1591 = vpack.c.b16 %v1303, %v1297
    %v1592 = vpack.c.b16 %v1304, %v1298
    %v1593 = vpack.c.b16 %v1305, %v1299
    %v1594 = vpack.c.b16 %v1306, %v1300
    %1883 = vmatprep.subr.bf16.mxu0 %v1308
    %1884 = vmatpush1.bf16.msra.mxu0 %v1307
    %1885 = vmatprep.subr.bf16.mxu0 %v1314
    %1886 = vmatpush1.bf16.msra.mxu0 %v1313
    %1887 = vmatprep.subr.bf16.mxu0 %v1320
    %1888 = vmatpush1.bf16.msra.mxu0 %v1319
    %1889 = vmatprep.subr.bf16.mxu0 %v1326
    %1890 = vmatpush1.bf16.msra.mxu0 %v1325
    %1891 = vmatprep.subr.bf16.mxu0 %v1332
    %1892 = vmatpush1.bf16.msra.mxu0 %v1331
    %1893 = vmatprep.subr.bf16.mxu0 %v1338
    %1894 = vmatpush1.bf16.msra.mxu0 %v1337
    %1895 = vmatprep.subr.bf16.mxu0 %v1344
    %1896 = vmatpush1.bf16.msra.mxu0 %v1343
    %1897 = vmatprep.subr.bf16.mxu0 %v1350
    %1898 = vmatpush1.bf16.msra.mxu0 %v1349
    %1899 = vmatprep.subr.bf16.mxu0 %v1356
    %1900 = vmatpush1.bf16.msra.mxu0 %v1355
    %1901 = vmatprep.subr.bf16.mxu0 %v1362
    %1902 = vmatpush1.bf16.msra.mxu0 %v1361
    %1903 = vmatprep.subr.bf16.mxu0 %v1368
    %1904 = vmatpush1.bf16.msra.mxu0 %v1367
    %1905 = vmatprep.subr.bf16.mxu0 %v1374
    %1906 = vmatpush1.bf16.msra.mxu0 %v1373
    %1907 = vmatprep.subr.bf16.mxu0 %v1380
    %1908 = vmatpush1.bf16.msra.mxu0 %v1379
    %1909 = vmatprep.subr.bf16.mxu0 %v1386
    %1910 = vmatpush1.bf16.msra.mxu0 %v1385
    %1911 = vmatprep.subr.bf16.mxu0 %v1392
    %1912 = vmatpush1.bf16.msra.mxu0 %v1391
    %1913 = vmatprep.subr.bf16.mxu0 %v1398
    %1914 = vmatpush1.bf16.msra.mxu0 %v1397
    %1915 = vmatprep.mubr.bf16.mxu0 %v118
    %1916 = vmatmul.mubr.bf16.gmra.mrb[0].mxu0 %v117
    %v1917 = vpop.f32.mrb[0].mxu0
    %v1918 = vadd.f32 %v416, %v1917
    %v1919 = vpop.f32.mrb[0].mxu0
    %v1920 = vadd.f32 %v420, %v1919
    %v1921 = vpop.f32.mrb[0].mxu0
    %v1922 = vadd.f32 %v416, %v1921
    %v1923 = vpop.f32.mrb[0].mxu0
    %v1924 = vadd.f32 %v420, %v1923
    %1925 = vdwg.mxu0
    %1926 = vmatprep.subr.bf16.mxu0 %v1404
    %1927 = vmatpush1.bf16.msra.mxu0 %v1403
    %1928 = vmatprep.subr.bf16.mxu0 %v1410
    %1929 = vmatpush1.bf16.msra.mxu0 %v1409
    %1930 = vmatprep.subr.bf16.mxu0 %v1416
    %1931 = vmatpush1.bf16.msra.mxu0 %v1415
    %1932 = vmatprep.subr.bf16.mxu0 %v1422
    %1933 = vmatpush1.bf16.msra.mxu0 %v1421
    %1934 = vmatprep.subr.bf16.mxu0 %v1428
    %1935 = vmatpush1.bf16.msra.mxu0 %v1427
    %1936 = vmatprep.subr.bf16.mxu0 %v1434
    %1937 = vmatpush1.bf16.msra.mxu0 %v1433
    %1938 = vmatprep.subr.bf16.mxu0 %v1440
    %1939 = vmatpush1.bf16.msra.mxu0 %v1439
    %1940 = vmatprep.subr.bf16.mxu0 %v1446
    %1941 = vmatpush1.bf16.msra.mxu0 %v1445
    %1942 = vmatprep.subr.bf16.mxu0 %v1452
    %1943 = vmatpush1.bf16.msra.mxu0 %v1451
    %1944 = vmatprep.subr.bf16.mxu0 %v1458
    %1945 = vmatpush1.bf16.msra.mxu0 %v1457
    %1946 = vmatprep.subr.bf16.mxu0 %v1464
    %1947 = vmatpush1.bf16.msra.mxu0 %v1463
    %1948 = vmatprep.subr.bf16.mxu0 %v1470
    %1949 = vmatpush1.bf16.msra.mxu0 %v1469
    %1950 = vmatprep.subr.bf16.mxu0 %v1476
    %1951 = vmatpush1.bf16.msra.mxu0 %v1475
    %1952 = vmatprep.subr.bf16.mxu0 %v1482
    %1953 = vmatpush1.bf16.msra.mxu0 %v1481
    %1954 = vmatprep.subr.bf16.mxu0 %v1488
    %1955 = vmatpush1.bf16.msra.mxu0 %v1487
    %1956 = vmatprep.subr.bf16.mxu0 %v1494
    %1957 = vmatpush1.bf16.msra.mxu0 %v1493
    %1958 = vmatprep.mubr.bf16.mxu0 %v120
    %1959 = vmatmul.mubr.bf16.gmra.mrb[0].mxu0 %v119
    %v1960 = vpop.f32.mrb[0].mxu0
    %v1961 = vadd.f32 %v1918, %v1960
    %v1962 = vpop.f32.mrb[0].mxu0
    %v1963 = vadd.f32 %v1920, %v1962
    %v1964 = vpop.f32.mrb[0].mxu0
    %v1965 = vadd.f32 %v1922, %v1964
    %v1966 = vpop.f32.mrb[0].mxu0
    %v1967 = vadd.f32 %v1924, %v1966
    %1968 = vdwg.mxu0
    %1969 = vmatprep.subr.bf16.mxu0 %v1500
    %1970 = vmatpush1.bf16.msra.mxu0 %v1499
    %1971 = vmatprep.subr.bf16.mxu0 %v1506
    %1972 = vmatpush1.bf16.msra.mxu0 %v1505
    %1973 = vmatprep.subr.bf16.mxu0 %v1512
    %1974 = vmatpush1.bf16.msra.mxu0 %v1511
    %1975 = vmatprep.subr.bf16.mxu0 %v1518
    %1976 = vmatpush1.bf16.msra.mxu0 %v1517
    %1977 = vmatprep.subr.bf16.mxu0 %v1524
    %1978 = vmatpush1.bf16.msra.mxu0 %v1523
    %1979 = vmatprep.subr.bf16.mxu0 %v1530
    %1980 = vmatpush1.bf16.msra.mxu0 %v1529
    %1981 = vmatprep.subr.bf16.mxu0 %v1536
    %1982 = vmatpush1.bf16.msra.mxu0 %v1535
    %1983 = vmatprep.subr.bf16.mxu0 %v1542
    %1984 = vmatpush1.bf16.msra.mxu0 %v1541
    %1985 = vmatprep.subr.bf16.mxu0 %v1548
    %1986 = vmatpush1.bf16.msra.mxu0 %v1547
    %1987 = vmatprep.subr.bf16.mxu0 %v1554
    %1988 = vmatpush1.bf16.msra.mxu0 %v1553
    %1989 = vmatprep.subr.bf16.mxu0 %v1560
    %1990 = vmatpush1.bf16.msra.mxu0 %v1559
    %1991 = vmatprep.subr.bf16.mxu0 %v1566
    %1992 = vmatpush1.bf16.msra.mxu0 %v1565
    %1993 = vmatprep.subr.bf16.mxu0 %v1572
    %1994 = vmatpush1.bf16.msra.mxu0 %v1571
    %1995 = vmatprep.subr.bf16.mxu0 %v1578
    %1996 = vmatpush1.bf16.msra.mxu0 %v1577
    %1997 = vmatprep.subr.bf16.mxu0 %v1584
    %1998 = vmatpush1.bf16.msra.mxu0 %v1583
    %1999 = vmatprep.subr.bf16.mxu0 %v1590
    %2000 = vmatpush1.bf16.msra.mxu0 %v1589
    %2001 = vmatprep.mubr.bf16.mxu0 %v122
    %2002 = vmatmul.mubr.bf16.gmra.mrb[0].mxu0 %v121
    %v2003 = vpop.f32.mrb[0].mxu0
    %v2004 = vadd.f32 %v1961, %v2003
    %v2005 = vpop.f32.mrb[0].mxu0
    %v2006 = vadd.f32 %v1963, %v2005
    %v2007 = vpop.f32.mrb[0].mxu0
    %v2008 = vadd.f32 %v1965, %v2007
    %v2009 = vpop.f32.mrb[0].mxu0
    %v2010 = vadd.f32 %v1967, %v2009
    %2011 = vdwg.mxu0
    %2012 = vmatprep.subr.bf16.mxu0 %v1310
    %2013 = vmatpush1.bf16.msra.mxu0 %v1309
    %2014 = vmatprep.subr.bf16.mxu0 %v1316
    %2015 = vmatpush1.bf16.msra.mxu0 %v1315
    %2016 = vmatprep.subr.bf16.mxu0 %v1322
    %2017 = vmatpush1.bf16.msra.mxu0 %v1321
    %2018 = vmatprep.subr.bf16.mxu0 %v1328
    %2019 = vmatpush1.bf16.msra.mxu0 %v1327
    %2020 = vmatprep.subr.bf16.mxu0 %v1334
    %2021 = vmatpush1.bf16.msra.mxu0 %v1333
    %2022 = vmatprep.subr.bf16.mxu0 %v1340
    %2023 = vmatpush1.bf16.msra.mxu0 %v1339
    %2024 = vmatprep.subr.bf16.mxu0 %v1346
    %2025 = vmatpush1.bf16.msra.mxu0 %v1345
    %2026 = vmatprep.subr.bf16.mxu0 %v1352
    %2027 = vmatpush1.bf16.msra.mxu0 %v1351
    %2028 = vmatprep.subr.bf16.mxu0 %v1358
    %2029 = vmatpush1.bf16.msra.mxu0 %v1357
    %2030 = vmatprep.subr.bf16.mxu0 %v1364
    %2031 = vmatpush1.bf16.msra.mxu0 %v1363
    %2032 = vmatprep.subr.bf16.mxu0 %v1370
    %2033 = vmatpush1.bf16.msra.mxu0 %v1369
    %2034 = vmatprep.subr.bf16.mxu0 %v1376
    %2035 = vmatpush1.bf16.msra.mxu0 %v1375
    %2036 = vmatprep.subr.bf16.mxu0 %v1382
    %2037 = vmatpush1.bf16.msra.mxu0 %v1381
    %2038 = vmatprep.subr.bf16.mxu0 %v1388
    %2039 = vmatpush1.bf16.msra.mxu0 %v1387
    %2040 = vmatprep.subr.bf16.mxu0 %v1394
    %2041 = vmatpush1.bf16.msra.mxu0 %v1393
    %2042 = vmatprep.subr.bf16.mxu0 %v1400
    %2043 = vmatpush1.bf16.msra.mxu0 %v1399
    %2044 = vmatprep.mubr.bf16.mxu0 %v118
    %2045 = vmatmul.mubr.bf16.gmra.mrb[0].mxu0 %v117
    %v2046 = vpop.f32.mrb[0].mxu0
    %v2047 = vadd.f32 %v424, %v2046
    %v2048 = vpop.f32.mrb[0].mxu0
    %v2049 = vadd.f32 %v428, %v2048
    %v2050 = vpop.f32.mrb[0].mxu0
    %v2051 = vadd.f32 %v424, %v2050
    %v2052 = vpop.f32.mrb[0].mxu0
    %v2053 = vadd.f32 %v428, %v2052
    %2054 = vdwg.mxu0
    %2055 = vmatprep.subr.bf16.mxu0 %v1406
    %2056 = vmatpush1.bf16.msra.mxu0 %v1405
    %2057 = vmatprep.subr.bf16.mxu0 %v1412
    %2058 = vmatpush1.bf16.msra.mxu0 %v1411
    %2059 = vmatprep.subr.bf16.mxu0 %v1418
    %2060 = vmatpush1.bf16.msra.mxu0 %v1417
    %2061 = vmatprep.subr.bf16.mxu0 %v1424
    %2062 = vmatpush1.bf16.msra.mxu0 %v1423
    %2063 = vmatprep.subr.bf16.mxu0 %v1430
    %2064 = vmatpush1.bf16.msra.mxu0 %v1429
    %2065 = vmatprep.subr.bf16.mxu0 %v1436
    %2066 = vmatpush1.bf16.msra.mxu0 %v1435
    %2067 = vmatprep.subr.bf16.mxu0 %v1442
    %2068 = vmatpush1.bf16.msra.mxu0 %v1441
    %2069 = vmatprep.subr.bf16.mxu0 %v1448
    %2070 = vmatpush1.bf16.msra.mxu0 %v1447
    %2071 = vmatprep.subr.bf16.mxu0 %v1454
    %2072 = vmatpush1.bf16.msra.mxu0 %v1453
    %2073 = vmatprep.subr.bf16.mxu0 %v1460
    %2074 = vmatpush1.bf16.msra.mxu0 %v1459
    %2075 = vmatprep.subr.bf16.mxu0 %v1466
    %2076 = vmatpush1.bf16.msra.mxu0 %v1465
    %2077 = vmatprep.subr.bf16.mxu0 %v1472
    %2078 = vmatpush1.bf16.msra.mxu0 %v1471
    %2079 = vmatprep.subr.bf16.mxu0 %v1478
    %2080 = vmatpush1.bf16.msra.mxu0 %v1477
    %2081 = vmatprep.subr.bf16.mxu0 %v1484
    %2082 = vmatpush1.bf16.msra.mxu0 %v1483
    %2083 = vmatprep.subr.bf16.mxu0 %v1490
    %2084 = vmatpush1.bf16.msra.mxu0 %v1489
    %2085 = vmatprep.subr.bf16.mxu0 %v1496
    %2086 = vmatpush1.bf16.msra.mxu0 %v1495
    %2087 = vmatprep.mubr.bf16.mxu0 %v120
    %2088 = vmatmul.mubr.bf16.gmra.mrb[0].mxu0 %v119
    %v2089 = vpop.f32.mrb[0].mxu0
    %v2090 = vadd.f32 %v2047, %v2089
    %v2091 = vpop.f32.mrb[0].mxu0
    %v2092 = vadd.f32 %v2049, %v2091
    %v2093 = vpop.f32.mrb[0].mxu0
    %v2094 = vadd.f32 %v2051, %v2093
    %v2095 = vpop.f32.mrb[0].mxu0
    %v2096 = vadd.f32 %v2053, %v2095
    %2097 = vdwg.mxu0
    %2098 = vmatprep.subr.bf16.mxu0 %v1502
    %2099 = vmatpush1.bf16.msra.mxu0 %v1501
    %2100 = vmatprep.subr.bf16.mxu0 %v1508
    %2101 = vmatpush1.bf16.msra.mxu0 %v1507
    %2102 = vmatprep.subr.bf16.mxu0 %v1514
    %2103 = vmatpush1.bf16.msra.mxu0 %v1513
    %2104 = vmatprep.subr.bf16.mxu0 %v1520
    %2105 = vmatpush1.bf16.msra.mxu0 %v1519
    %2106 = vmatprep.subr.bf16.mxu0 %v1526
    %2107 = vmatpush1.bf16.msra.mxu0 %v1525
    %2108 = vmatprep.subr.bf16.mxu0 %v1532
    %2109 = vmatpush1.bf16.msra.mxu0 %v1531
    %2110 = vmatprep.subr.bf16.mxu0 %v1538
    %2111 = vmatpush1.bf16.msra.mxu0 %v1537
    %2112 = vmatprep.subr.bf16.mxu0 %v1544
    %2113 = vmatpush1.bf16.msra.mxu0 %v1543
    %2114 = vmatprep.subr.bf16.mxu0 %v1550
    %2115 = vmatpush1.bf16.msra.mxu0 %v1549
    %2116 = vmatprep.subr.bf16.mxu0 %v1556
    %2117 = vmatpush1.bf16.msra.mxu0 %v1555
    %2118 = vmatprep.subr.bf16.mxu0 %v1562
    %2119 = vmatpush1.bf16.msra.mxu0 %v1561
    %2120 = vmatprep.subr.bf16.mxu0 %v1568
    %2121 = vmatpush1.bf16.msra.mxu0 %v1567
    %2122 = vmatprep.subr.bf16.mxu0 %v1574
    %2123 = vmatpush1.bf16.msra.mxu0 %v1573
    %2124 = vmatprep.subr.bf16.mxu0 %v1580
    %2125 = vmatpush1.bf16.msra.mxu0 %v1579
    %2126 = vmatprep.subr.bf16.mxu0 %v1586
    %2127 = vmatpush1.bf16.msra.mxu0 %v1585
    %2128 = vmatprep.subr.bf16.mxu0 %v1592
    %2129 = vmatpush1.bf16.msra.mxu0 %v1591
    %2130 = vmatprep.mubr.bf16.mxu0 %v122
    %2131 = vmatmul.mubr.bf16.gmra.mrb[0].mxu0 %v121
    %v2132 = vpop.f32.mrb[0].mxu0
    %v2133 = vadd.f32 %v2090, %v2132
    %v2134 = vpop.f32.mrb[0].mxu0
    %v2135 = vadd.f32 %v2092, %v2134
    %v2136 = vpop.f32.mrb[0].mxu0
    %v2137 = vadd.f32 %v2094, %v2136
    %v2138 = vpop.f32.mrb[0].mxu0
    %v2139 = vadd.f32 %v2096, %v2138
    %2140 = vdwg.mxu0
    %2141 = vmatprep.subr.bf16.mxu0 %v1312
    %2142 = vmatpush1.bf16.msra.mxu0 %v1311
    %2143 = vmatprep.subr.bf16.mxu0 %v1318
    %2144 = vmatpush1.bf16.msra.mxu0 %v1317
    %2145 = vmatprep.subr.bf16.mxu0 %v1324
    %2146 = vmatpush1.bf16.msra.mxu0 %v1323
    %2147 = vmatprep.subr.bf16.mxu0 %v1330
    %2148 = vmatpush1.bf16.msra.mxu0 %v1329
    %2149 = vmatprep.subr.bf16.mxu0 %v1336
    %2150 = vmatpush1.bf16.msra.mxu0 %v1335
    %2151 = vmatprep.subr.bf16.mxu0 %v1342
    %2152 = vmatpush1.bf16.msra.mxu0 %v1341
    %2153 = vmatprep.subr.bf16.mxu0 %v1348
    %2154 = vmatpush1.bf16.msra.mxu0 %v1347
    %2155 = vmatprep.subr.bf16.mxu0 %v1354
    %2156 = vmatpush1.bf16.msra.mxu0 %v1353
    %2157 = vmatprep.subr.bf16.mxu0 %v1360
    %2158 = vmatpush1.bf16.msra.mxu0 %v1359
    %2159 = vmatprep.subr.bf16.mxu0 %v1366
    %2160 = vmatpush1.bf16.msra.mxu0 %v1365
    %2161 = vmatprep.subr.bf16.mxu0 %v1372
    %2162 = vmatpush1.bf16.msra.mxu0 %v1371
    %2163 = vmatprep.subr.bf16.mxu0 %v1378
    %2164 = vmatpush1.bf16.msra.mxu0 %v1377
    %2165 = vmatprep.subr.bf16.mxu0 %v1384
    %2166 = vmatpush1.bf16.msra.mxu0 %v1383
    %2167 = vmatprep.subr.bf16.mxu0 %v1390
    %2168 = vmatpush1.bf16.msra.mxu0 %v1389
    %2169 = vmatprep.subr.bf16.mxu0 %v1396
    %2170 = vmatpush1.bf16.msra.mxu0 %v1395
    %2171 = vmatprep.subr.bf16.mxu0 %v1402
    %2172 = vmatpush1.bf16.msra.mxu0 %v1401
    %2173 = vmatprep.mubr.bf16.mxu0 %v118
    %2174 = vmatmul.mubr.bf16.gmra.mrb[0].mxu0 %v117
    %v2175 = vpop.f32.mrb[0].mxu0
    %v2176 = vadd.f32 %v432, %v2175
    %v2177 = vpop.f32.mrb[0].mxu0
    %v2178 = vadd.f32 %v436, %v2177
    %v2179 = vpop.f32.mrb[0].mxu0
    %v2180 = vadd.f32 %v432, %v2179
    %v2181 = vpop.f32.mrb[0].mxu0
    %v2182 = vadd.f32 %v436, %v2181
    %2183 = vdwg.mxu0
    %2184 = vmatprep.subr.bf16.mxu0 %v1408
    %2185 = vmatpush1.bf16.msra.mxu0 %v1407
    %2186 = vmatprep.subr.bf16.mxu0 %v1414
    %2187 = vmatpush1.bf16.msra.mxu0 %v1413
    %2188 = vmatprep.subr.bf16.mxu0 %v1420
    %2189 = vmatpush1.bf16.msra.mxu0 %v1419
    %2190 = vmatprep.subr.bf16.mxu0 %v1426
    %2191 = vmatpush1.bf16.msra.mxu0 %v1425
    %2192 = vmatprep.subr.bf16.mxu0 %v1432
    %2193 = vmatpush1.bf16.msra.mxu0 %v1431
    %2194 = vmatprep.subr.bf16.mxu0 %v1438
    %2195 = vmatpush1.bf16.msra.mxu0 %v1437
    %2196 = vmatprep.subr.bf16.mxu0 %v1444
    %2197 = vmatpush1.bf16.msra.mxu0 %v1443
    %2198 = vmatprep.subr.bf16.mxu0 %v1450
    %2199 = vmatpush1.bf16.msra.mxu0 %v1449
    %2200 = vmatprep.subr.bf16.mxu0 %v1456
    %2201 = vmatpush1.bf16.msra.mxu0 %v1455
    %2202 = vmatprep.subr.bf16.mxu0 %v1462
    %2203 = vmatpush1.bf16.msra.mxu0 %v1461
    %2204 = vmatprep.subr.bf16.mxu0 %v1468
    %2205 = vmatpush1.bf16.msra.mxu0 %v1467
    %2206 = vmatprep.subr.bf16.mxu0 %v1474
    %2207 = vmatpush1.bf16.msra.mxu0 %v1473
    %2208 = vmatprep.subr.bf16.mxu0 %v1480
    %2209 = vmatpush1.bf16.msra.mxu0 %v1479
    %2210 = vmatprep.subr.bf16.mxu0 %v1486
    %2211 = vmatpush1.bf16.msra.mxu0 %v1485
    %2212 = vmatprep.subr.bf16.mxu0 %v1492
    %2213 = vmatpush1.bf16.msra.mxu0 %v1491
    %2214 = vmatprep.subr.bf16.mxu0 %v1498
    %2215 = vmatpush1.bf16.msra.mxu0 %v1497
    %2216 = vmatprep.mubr.bf16.mxu0 %v120
    %2217 = vmatmul.mubr.bf16.gmra.mrb[0].mxu0 %v119
    %v2218 = vpop.f32.mrb[0].mxu0
    %v2219 = vadd.f32 %v2176, %v2218
    %v2220 = vpop.f32.mrb[0].mxu0
    %v2221 = vadd.f32 %v2178, %v2220
    %v2222 = vpop.f32.mrb[0].mxu0
    %v2223 = vadd.f32 %v2180, %v2222
    %v2224 = vpop.f32.mrb[0].mxu0
    %v2225 = vadd.f32 %v2182, %v2224
    %2226 = vdwg.mxu0
    %2227 = vmatprep.subr.bf16.mxu0 %v1504
    %2228 = vmatpush1.bf16.msra.mxu0 %v1503
    %2229 = vmatprep.subr.bf16.mxu0 %v1510
    %2230 = vmatpush1.bf16.msra.mxu0 %v1509
    %2231 = vmatprep.subr.bf16.mxu0 %v1516
    %2232 = vmatpush1.bf16.msra.mxu0 %v1515
    %2233 = vmatprep.subr.bf16.mxu0 %v1522
    %2234 = vmatpush1.bf16.msra.mxu0 %v1521
    %2235 = vmatprep.subr.bf16.mxu0 %v1528
    %2236 = vmatpush1.bf16.msra.mxu0 %v1527
    %2237 = vmatprep.subr.bf16.mxu0 %v1534
    %2238 = vmatpush1.bf16.msra.mxu0 %v1533
    %2239 = vmatprep.subr.bf16.mxu0 %v1540
    %2240 = vmatpush1.bf16.msra.mxu0 %v1539
    %2241 = vmatprep.subr.bf16.mxu0 %v1546
    %2242 = vmatpush1.bf16.msra.mxu0 %v1545
    %2243 = vmatprep.subr.bf16.mxu0 %v1552
    %2244 = vmatpush1.bf16.msra.mxu0 %v1551
    %2245 = vmatprep.subr.bf16.mxu0 %v1558
    %2246 = vmatpush1.bf16.msra.mxu0 %v1557
    %2247 = vmatprep.subr.bf16.mxu0 %v1564
    %2248 = vmatpush1.bf16.msra.mxu0 %v1563
    %2249 = vmatprep.subr.bf16.mxu0 %v1570
    %2250 = vmatpush1.bf16.msra.mxu0 %v1569
    %2251 = vmatprep.subr.bf16.mxu0 %v1576
    %2252 = vmatpush1.bf16.msra.mxu0 %v1575
    %2253 = vmatprep.subr.bf16.mxu0 %v1582
    %2254 = vmatpush1.bf16.msra.mxu0 %v1581
    %2255 = vmatprep.subr.bf16.mxu0 %v1588
    %2256 = vmatpush1.bf16.msra.mxu0 %v1587
    %2257 = vmatprep.subr.bf16.mxu0 %v1594
    %2258 = vmatpush1.bf16.msra.mxu0 %v1593
    %2259 = vmatprep.mubr.bf16.mxu0 %v122
    %2260 = vmatmul.mubr.bf16.gmra.mrb[0].mxu0 %v121
    %v2261 = vpop.f32.mrb[0].mxu0
    %v2262 = vadd.f32 %v2219, %v2261
    %v2263 = vpop.f32.mrb[0].mxu0
    %v2264 = vadd.f32 %v2221, %v2263
    %v2265 = vpop.f32.mrb[0].mxu0
    %v2266 = vadd.f32 %v2223, %v2265
    %v2267 = vpop.f32.mrb[0].mxu0
    %v2268 = vadd.f32 %v2225, %v2267
    %2269 = vdwg.mxu0
    %v2270 = vmul.f32 %v2004, %v2004
    %v2271 = vmul.f32 %v2006, %v2006
    %v2272 = vmul.f32 %v2133, %v2133
    %v2273 = vmul.f32 %v2135, %v2135
    %v2274 = vmul.f32 %v2262, %v2262
    %v2275 = vmul.f32 %v2264, %v2264
    %v2276 = vmul.f32 %v2008, %v2008
    %v2277 = vmul.f32 %v2010, %v2010
    %v2278 = vmul.f32 %v2137, %v2137
    %v2279 = vmul.f32 %v2139, %v2139
    %v2280 = vmul.f32 %v2266, %v2266
    %v2281 = vmul.f32 %v2268, %v2268
    %v2282 = vmul.f32 %v2004, %v2270
    %v2283 = vmul.f32 %v2006, %v2271
    %v2284 = vmul.f32 %v2133, %v2272
    %v2285 = vmul.f32 %v2135, %v2273
    %v2286 = vmul.f32 %v2262, %v2274
    %v2287 = vmul.f32 %v2264, %v2275
    %v2288 = vmul.f32 %v2008, %v2276
    %v2289 = vmul.f32 %v2010, %v2277
    %v2290 = vmul.f32 %v2137, %v2278
    %v2291 = vmul.f32 %v2139, %v2279
    %v2292 = vmul.f32 %v2266, %v2280
    %v2293 = vmul.f32 %v2268, %v2281
    %v2294 = vmul.f32 %v2282, 0.044715
    %v2295 = vmul.f32 %v2283, 0.044715
    %v2296 = vmul.f32 %v2284, 0.044715
    %v2297 = vmul.f32 %v2285, 0.044715
    %v2298 = vmul.f32 %v2286, 0.044715
    %v2299 = vmul.f32 %v2287, 0.044715
    %v2300 = vmul.f32 %v2288, 0.044715
    %v2301 = vmul.f32 %v2289, 0.044715
    %v2302 = vmul.f32 %v2290, 0.044715
    %v2303 = vmul.f32 %v2291, 0.044715
    %v2304 = vmul.f32 %v2292, 0.044715
    %v2305 = vmul.f32 %v2293, 0.044715
    %v2306 = vadd.f32 %v2004, %v2294
    %v2307 = vadd.f32 %v2006, %v2295
    %v2308 = vadd.f32 %v2133, %v2296
    %v2309 = vadd.f32 %v2135, %v2297
    %v2310 = vadd.f32 %v2262, %v2298
    %v2311 = vadd.f32 %v2264, %v2299
    %v2312 = vadd.f32 %v2008, %v2300
    %v2313 = vadd.f32 %v2010, %v2301
    %v2314 = vadd.f32 %v2137, %v2302
    %v2315 = vadd.f32 %v2139, %v2303
    %v2316 = vadd.f32 %v2266, %v2304
    %v2317 = vadd.f32 %v2268, %v2305
    %v2318 = vmul.f32 %v2306, 0.7978846
    %v2319 = vmul.f32 %v2307, 0.7978846
    %v2320 = vmul.f32 %v2308, 0.7978846
    %v2321 = vmul.f32 %v2309, 0.7978846
    %v2322 = vmul.f32 %v2310, 0.7978846
    %v2323 = vmul.f32 %v2311, 0.7978846
    %v2324 = vmul.f32 %v2312, 0.7978846
    %v2325 = vmul.f32 %v2313, 0.7978846
    %v2326 = vmul.f32 %v2314, 0.7978846
    %v2327 = vmul.f32 %v2315, 0.7978846
    %v2328 = vmul.f32 %v2316, 0.7978846
    %v2329 = vmul.f32 %v2317, 0.7978846
    %v2330 = vtanh.pop %v2318
    %v2331 = vtanh.pop %v2319
    %v2332 = vtanh.pop %v2320
    %v2333 = vtanh.pop %v2321
    %v2334 = vtanh.pop %v2322
    %v2335 = vtanh.pop %v2323
    %v2336 = vtanh.pop %v2324
    %v2337 = vtanh.pop %v2325
    %v2338 = vtanh.pop %v2326
    %v2339 = vtanh.pop %v2327
    %v2340 = vtanh.pop %v2328
    %v2341 = vtanh.pop %v2329
    %v2342 = vadd.f32 %v2330, 1.0
    %v2343 = vadd.f32 %v2331, 1.0
    %v2344 = vadd.f32 %v2332, 1.0
    %v2345 = vadd.f32 %v2333, 1.0
    %v2346 = vadd.f32 %v2334, 1.0
    %v2347 = vadd.f32 %v2335, 1.0
    %v2348 = vadd.f32 %v2336, 1.0
    %v2349 = vadd.f32 %v2337, 1.0
    %v2350 = vadd.f32 %v2338, 1.0
    %v2351 = vadd.f32 %v2339, 1.0
    %v2352 = vadd.f32 %v2340, 1.0
    %v2353 = vadd.f32 %v2341, 1.0
    %v2354 = vmul.f32 %v2342, 0.5
    %v2355 = vmul.f32 %v2343, 0.5
    %v2356 = vmul.f32 %v2344, 0.5
    %v2357 = vmul.f32 %v2345, 0.5
    %v2358 = vmul.f32 %v2346, 0.5
    %v2359 = vmul.f32 %v2347, 0.5
    %v2360 = vmul.f32 %v2348, 0.5
    %v2361 = vmul.f32 %v2349, 0.5
    %v2362 = vmul.f32 %v2350, 0.5
    %v2363 = vmul.f32 %v2351, 0.5
    %v2364 = vmul.f32 %v2352, 0.5
    %v2365 = vmul.f32 %v2353, 0.5
    %v2366 = vmul.f32 %v2004, %v2354
    %v2367 = vmul.f32 %v2006, %v2355
    %v2368 = vmul.f32 %v2133, %v2356
    %v2369 = vmul.f32 %v2135, %v2357
    %v2370 = vmul.f32 %v2262, %v2358
    %v2371 = vmul.f32 %v2264, %v2359
    %v2372 = vmul.f32 %v2008, %v2360
    %v2373 = vmul.f32 %v2010, %v2361
    %v2374 = vmul.f32 %v2137, %v2362
    %v2375 = vmul.f32 %v2139, %v2363
    %v2376 = vmul.f32 %v2266, %v2364
    %v2377 = vmul.f32 %v2268, %v2365
    %s2378 = smul.u32 4, 96
    %s2379 = smul.u32 %s2378, 6
    %s2380 = sshll.u32 %s2379, 4
    %2381 = dma.done [#allocation3], %s2380
    %v2382 = vpack.c.bf16 %v2372, %v2366
    %v2383 = vpack.c.bf16 %v2373, %v2367
    %v2384 = vpack.c.bf16 %v2374, %v2368
    %v2385 = vpack.c.bf16 %v2375, %v2369
    %v2386 = vpack.c.bf16 %v2376, %v2370
    %v2387 = vpack.c.bf16 %v2377, %v2371
    %v2388 = vld [vmem:[#allocation2] sm:$0xff]
    %v2389 = vld [vmem:[#allocation2 + $0x8] sm:$0xff]
    %v2390 = vld [vmem:[#allocation2 + $0x10] sm:$0xff]
    %v2391 = vld [vmem:[#allocation2 + $0x18] sm:$0xff]
    %v2392 = vld [vmem:[#allocation2 + $0x20] sm:$0xff]
    %v2393 = vld [vmem:[#allocation2 + $0x28] sm:$0xff]
    %v2394 = vld [vmem:[#allocation2 + $0x30] sm:$0xff]
    %v2395 = vld [vmem:[#allocation2 + $0x38] sm:$0xff]
    %v2396 = vld [vmem:[#allocation2 + $0x40] sm:$0xff]
    %v2397 = vld [vmem:[#allocation2 + $0x48] sm:$0xff]
    %v2398 = vld [vmem:[#allocation2 + $0x50] sm:$0xff]
    %v2399 = vld [vmem:[#allocation2 + $0x58] sm:$0xff]
    %v2400 = vld [vmem:[#allocation2 + $0x60] sm:$0xff]
    %v2401 = vld [vmem:[#allocation2 + $0x68] sm:$0xff]
    %v2402 = vld [vmem:[#allocation2 + $0x70] sm:$0xff]
    %v2403 = vld [vmem:[#allocation2 + $0x78] sm:$0xff]
    %v2404 = vld [vmem:[#allocation2 + $0x80] sm:$0xff]
    %v2405 = vld [vmem:[#allocation2 + $0x88] sm:$0xff]
    %v2406 = vld [vmem:[#allocation2 + $0x90] sm:$0xff]
    %v2407 = vld [vmem:[#allocation2 + $0x98] sm:$0xff]
    %v2408 = vld [vmem:[#allocation2 + $0xa0] sm:$0xff]
    %v2409 = vld [vmem:[#allocation2 + $0xa8] sm:$0xff]
    %v2410 = vld [vmem:[#allocation2 + $0xb0] sm:$0xff]
    %v2411 = vld [vmem:[#allocation2 + $0xb8] sm:$0xff]
    %v2412 = vld [vmem:[#allocation2 + $0xc0] sm:$0xff]
    %v2413 = vld [vmem:[#allocation2 + $0xc8] sm:$0xff]
    %v2414 = vld [vmem:[#allocation2 + $0xd0] sm:$0xff]
    %v2415 = vld [vmem:[#allocation2 + $0xd8] sm:$0xff]
    %v2416 = vld [vmem:[#allocation2 + $0xe0] sm:$0xff]
    %v2417 = vld [vmem:[#allocation2 + $0xe8] sm:$0xff]
    %v2418 = vld [vmem:[#allocation2 + $0xf0] sm:$0xff]
    %v2419 = vld [vmem:[#allocation2 + $0xf8] sm:$0xff]
    %v2420 = vld [vmem:[#allocation2 + $0x100] sm:$0xff]
    %v2421 = vld [vmem:[#allocation2 + $0x108] sm:$0xff]
    %v2422 = vld [vmem:[#allocation2 + $0x110] sm:$0xff]
    %v2423 = vld [vmem:[#allocation2 + $0x118] sm:$0xff]
    %v2424 = vld [vmem:[#allocation2 + $0x120] sm:$0xff]
    %v2425 = vld [vmem:[#allocation2 + $0x128] sm:$0xff]
    %v2426 = vld [vmem:[#allocation2 + $0x130] sm:$0xff]
    %v2427 = vld [vmem:[#allocation2 + $0x138] sm:$0xff]
    %v2428 = vld [vmem:[#allocation2 + $0x140] sm:$0xff]
    %v2429 = vld [vmem:[#allocation2 + $0x148] sm:$0xff]
    %v2430 = vld [vmem:[#allocation2 + $0x150] sm:$0xff]
    %v2431 = vld [vmem:[#allocation2 + $0x158] sm:$0xff]
    %v2432 = vld [vmem:[#allocation2 + $0x160] sm:$0xff]
    %v2433 = vld [vmem:[#allocation2 + $0x168] sm:$0xff]
    %v2434 = vld [vmem:[#allocation2 + $0x170] sm:$0xff]
    %v2435 = vld [vmem:[#allocation2 + $0x178] sm:$0xff]
    %v2436 = vld [vmem:[#allocation2 + $0x180] sm:$0xff]
    %v2437 = vld [vmem:[#allocation2 + $0x188] sm:$0xff]
    %v2438 = vld [vmem:[#allocation2 + $0x190] sm:$0xff]
    %v2439 = vld [vmem:[#allocation2 + $0x198] sm:$0xff]
    %v2440 = vld [vmem:[#allocation2 + $0x1a0] sm:$0xff]
    %v2441 = vld [vmem:[#allocation2 + $0x1a8] sm:$0xff]
    %v2442 = vld [vmem:[#allocation2 + $0x1b0] sm:$0xff]
    %v2443 = vld [vmem:[#allocation2 + $0x1b8] sm:$0xff]
    %v2444 = vld [vmem:[#allocation2 + $0x1c0] sm:$0xff]
    %v2445 = vld [vmem:[#allocation2 + $0x1c8] sm:$0xff]
    %v2446 = vld [vmem:[#allocation2 + $0x1d0] sm:$0xff]
    %v2447 = vld [vmem:[#allocation2 + $0x1d8] sm:$0xff]
    %v2448 = vld [vmem:[#allocation2 + $0x1e0] sm:$0xff]
    %v2449 = vld [vmem:[#allocation2 + $0x1e8] sm:$0xff]
    %v2450 = vld [vmem:[#allocation2 + $0x1f0] sm:$0xff]
    %v2451 = vld [vmem:[#allocation2 + $0x1f8] sm:$0xff]
    %v2452 = vld [vmem:[#allocation2 + $0x200] sm:$0xff]
    %v2453 = vld [vmem:[#allocation2 + $0x208] sm:$0xff]
    %v2454 = vld [vmem:[#allocation2 + $0x210] sm:$0xff]
    %v2455 = vld [vmem:[#allocation2 + $0x218] sm:$0xff]
    %v2456 = vld [vmem:[#allocation2 + $0x220] sm:$0xff]
    %v2457 = vld [vmem:[#allocation2 + $0x228] sm:$0xff]
    %v2458 = vld [vmem:[#allocation2 + $0x230] sm:$0xff]
    %v2459 = vld [vmem:[#allocation2 + $0x238] sm:$0xff]
    %v2460 = vld [vmem:[#allocation2 + $0x240] sm:$0xff]
    %v2461 = vld [vmem:[#allocation2 + $0x248] sm:$0xff]
    %v2462 = vld [vmem:[#allocation2 + $0x250] sm:$0xff]
    %v2463 = vld [vmem:[#allocation2 + $0x258] sm:$0xff]
    %v2464 = vld [vmem:[#allocation2 + $0x260] sm:$0xff]
    %v2465 = vld [vmem:[#allocation2 + $0x268] sm:$0xff]
    %v2466 = vld [vmem:[#allocation2 + $0x270] sm:$0xff]
    %v2467 = vld [vmem:[#allocation2 + $0x278] sm:$0xff]
    %v2468 = vld [vmem:[#allocation2 + $0x280] sm:$0xff]
    %v2469 = vld [vmem:[#allocation2 + $0x288] sm:$0xff]
    %v2470 = vld [vmem:[#allocation2 + $0x290] sm:$0xff]
    %v2471 = vld [vmem:[#allocation2 + $0x298] sm:$0xff]
    %v2472 = vld [vmem:[#allocation2 + $0x2a0] sm:$0xff]
    %v2473 = vld [vmem:[#allocation2 + $0x2a8] sm:$0xff]
    %v2474 = vld [vmem:[#allocation2 + $0x2b0] sm:$0xff]
    %v2475 = vld [vmem:[#allocation2 + $0x2b8] sm:$0xff]
    %v2476 = vld [vmem:[#allocation2 + $0x2c0] sm:$0xff]
    %v2477 = vld [vmem:[#allocation2 + $0x2c8] sm:$0xff]
    %v2478 = vld [vmem:[#allocation2 + $0x2d0] sm:$0xff]
    %v2479 = vld [vmem:[#allocation2 + $0x2d8] sm:$0xff]
    %v2480 = vld [vmem:[#allocation2 + $0x2e0] sm:$0xff]
    %v2481 = vld [vmem:[#allocation2 + $0x2e8] sm:$0xff]
    %v2482 = vld [vmem:[#allocation2 + $0x2f0] sm:$0xff]
    %v2483 = vld [vmem:[#allocation2 + $0x2f8] sm:$0xff]
    %v2484 = vld [vmem:[#allocation2 + $0x300] sm:$0xff]
    %v2485 = vld [vmem:[#allocation2 + $0x308] sm:$0xff]
    %v2486 = vld [vmem:[#allocation2 + $0x310] sm:$0xff]
    %v2487 = vld [vmem:[#allocation2 + $0x318] sm:$0xff]
    %v2488 = vld [vmem:[#allocation2 + $0x320] sm:$0xff]
    %v2489 = vld [vmem:[#allocation2 + $0x328] sm:$0xff]
    %v2490 = vld [vmem:[#allocation2 + $0x330] sm:$0xff]
    %v2491 = vld [vmem:[#allocation2 + $0x338] sm:$0xff]
    %v2492 = vld [vmem:[#allocation2 + $0x340] sm:$0xff]
    %v2493 = vld [vmem:[#allocation2 + $0x348] sm:$0xff]
    %v2494 = vld [vmem:[#allocation2 + $0x350] sm:$0xff]
    %v2495 = vld [vmem:[#allocation2 + $0x358] sm:$0xff]
    %v2496 = vld [vmem:[#allocation2 + $0x360] sm:$0xff]
    %v2497 = vld [vmem:[#allocation2 + $0x368] sm:$0xff]
    %v2498 = vld [vmem:[#allocation2 + $0x370] sm:$0xff]
    %v2499 = vld [vmem:[#allocation2 + $0x378] sm:$0xff]
    %v2500 = vld [vmem:[#allocation2 + $0x380] sm:$0xff]
    %v2501 = vld [vmem:[#allocation2 + $0x388] sm:$0xff]
    %v2502 = vld [vmem:[#allocation2 + $0x390] sm:$0xff]
    %v2503 = vld [vmem:[#allocation2 + $0x398] sm:$0xff]
    %v2504 = vld [vmem:[#allocation2 + $0x3a0] sm:$0xff]
    %v2505 = vld [vmem:[#allocation2 + $0x3a8] sm:$0xff]
    %v2506 = vld [vmem:[#allocation2 + $0x3b0] sm:$0xff]
    %v2507 = vld [vmem:[#allocation2 + $0x3b8] sm:$0xff]
    %v2508 = vld [vmem:[#allocation2 + $0x3c0] sm:$0xff]
    %v2509 = vld [vmem:[#allocation2 + $0x3c8] sm:$0xff]
    %v2510 = vld [vmem:[#allocation2 + $0x3d0] sm:$0xff]
    %v2511 = vld [vmem:[#allocation2 + $0x3d8] sm:$0xff]
    %v2512 = vld [vmem:[#allocation2 + $0x3e0] sm:$0xff]
    %v2513 = vld [vmem:[#allocation2 + $0x3e8] sm:$0xff]
    %v2514 = vld [vmem:[#allocation2 + $0x3f0] sm:$0xff]
    %v2515 = vld [vmem:[#allocation2 + $0x3f8] sm:$0xff]
    %v2516 = vld [vmem:[#allocation2 + $0x400] sm:$0xff]
    %v2517 = vld [vmem:[#allocation2 + $0x408] sm:$0xff]
    %v2518 = vld [vmem:[#allocation2 + $0x410] sm:$0xff]
    %v2519 = vld [vmem:[#allocation2 + $0x418] sm:$0xff]
    %v2520 = vld [vmem:[#allocation2 + $0x420] sm:$0xff]
    %v2521 = vld [vmem:[#allocation2 + $0x428] sm:$0xff]
    %v2522 = vld [vmem:[#allocation2 + $0x430] sm:$0xff]
    %v2523 = vld [vmem:[#allocation2 + $0x438] sm:$0xff]
    %v2524 = vld [vmem:[#allocation2 + $0x440] sm:$0xff]
    %v2525 = vld [vmem:[#allocation2 + $0x448] sm:$0xff]
    %v2526 = vld [vmem:[#allocation2 + $0x450] sm:$0xff]
    %v2527 = vld [vmem:[#allocation2 + $0x458] sm:$0xff]
    %v2528 = vld [vmem:[#allocation2 + $0x460] sm:$0xff]
    %v2529 = vld [vmem:[#allocation2 + $0x468] sm:$0xff]
    %v2530 = vld [vmem:[#allocation2 + $0x470] sm:$0xff]
    %v2531 = vld [vmem:[#allocation2 + $0x478] sm:$0xff]
    %v2532 = vld [vmem:[#allocation2 + $0x480] sm:$0xff]
    %v2533 = vld [vmem:[#allocation2 + $0x488] sm:$0xff]
    %v2534 = vld [vmem:[#allocation2 + $0x490] sm:$0xff]
    %v2535 = vld [vmem:[#allocation2 + $0x498] sm:$0xff]
    %v2536 = vld [vmem:[#allocation2 + $0x4a0] sm:$0xff]
    %v2537 = vld [vmem:[#allocation2 + $0x4a8] sm:$0xff]
    %v2538 = vld [vmem:[#allocation2 + $0x4b0] sm:$0xff]
    %v2539 = vld [vmem:[#allocation2 + $0x4b8] sm:$0xff]
    %v2540 = vld [vmem:[#allocation2 + $0x4c0] sm:$0xff]
    %v2541 = vld [vmem:[#allocation2 + $0x4c8] sm:$0xff]
    %v2542 = vld [vmem:[#allocation2 + $0x4d0] sm:$0xff]
    %v2543 = vld [vmem:[#allocation2 + $0x4d8] sm:$0xff]
    %v2544 = vld [vmem:[#allocation2 + $0x4e0] sm:$0xff]
    %v2545 = vld [vmem:[#allocation2 + $0x4e8] sm:$0xff]
    %v2546 = vld [vmem:[#allocation2 + $0x4f0] sm:$0xff]
    %v2547 = vld [vmem:[#allocation2 + $0x4f8] sm:$0xff]
    %v2548 = vld [vmem:[#allocation2 + $0x500] sm:$0xff]
    %v2549 = vld [vmem:[#allocation2 + $0x508] sm:$0xff]
    %v2550 = vld [vmem:[#allocation2 + $0x510] sm:$0xff]
    %v2551 = vld [vmem:[#allocation2 + $0x518] sm:$0xff]
    %v2552 = vld [vmem:[#allocation2 + $0x520] sm:$0xff]
    %v2553 = vld [vmem:[#allocation2 + $0x528] sm:$0xff]
    %v2554 = vld [vmem:[#allocation2 + $0x530] sm:$0xff]
    %v2555 = vld [vmem:[#allocation2 + $0x538] sm:$0xff]
    %v2556 = vld [vmem:[#allocation2 + $0x540] sm:$0xff]
    %v2557 = vld [vmem:[#allocation2 + $0x548] sm:$0xff]
    %v2558 = vld [vmem:[#allocation2 + $0x550] sm:$0xff]
    %v2559 = vld [vmem:[#allocation2 + $0x558] sm:$0xff]
    %v2560 = vld [vmem:[#allocation2 + $0x560] sm:$0xff]
    %v2561 = vld [vmem:[#allocation2 + $0x568] sm:$0xff]
    %v2562 = vld [vmem:[#allocation2 + $0x570] sm:$0xff]
    %v2563 = vld [vmem:[#allocation2 + $0x578] sm:$0xff]
    %v2564 = vld [vmem:[#allocation2 + $0x580] sm:$0xff]
    %v2565 = vld [vmem:[#allocation2 + $0x588] sm:$0xff]
    %v2566 = vld [vmem:[#allocation2 + $0x590] sm:$0xff]
    %v2567 = vld [vmem:[#allocation2 + $0x598] sm:$0xff]
    %v2568 = vld [vmem:[#allocation2 + $0x5a0] sm:$0xff]
    %v2569 = vld [vmem:[#allocation2 + $0x5a8] sm:$0xff]
    %v2570 = vld [vmem:[#allocation2 + $0x5b0] sm:$0xff]
    %v2571 = vld [vmem:[#allocation2 + $0x5b8] sm:$0xff]
    %v2572 = vld [vmem:[#allocation2 + $0x5c0] sm:$0xff]
    %v2573 = vld [vmem:[#allocation2 + $0x5c8] sm:$0xff]
    %v2574 = vld [vmem:[#allocation2 + $0x5d0] sm:$0xff]
    %v2575 = vld [vmem:[#allocation2 + $0x5d8] sm:$0xff]
    %v2576 = vld [vmem:[#allocation2 + $0x5e0] sm:$0xff]
    %v2577 = vld [vmem:[#allocation2 + $0x5e8] sm:$0xff]
    %v2578 = vld [vmem:[#allocation2 + $0x5f0] sm:$0xff]
    %v2579 = vld [vmem:[#allocation2 + $0x5f8] sm:$0xff]
    %v2580 = vld [vmem:[#allocation2 + $0x600] sm:$0xff]
    %v2581 = vld [vmem:[#allocation2 + $0x608] sm:$0xff]
    %v2582 = vld [vmem:[#allocation2 + $0x610] sm:$0xff]
    %v2583 = vld [vmem:[#allocation2 + $0x618] sm:$0xff]
    %v2584 = vld [vmem:[#allocation2 + $0x620] sm:$0xff]
    %v2585 = vld [vmem:[#allocation2 + $0x628] sm:$0xff]
    %v2586 = vld [vmem:[#allocation2 + $0x630] sm:$0xff]
    %v2587 = vld [vmem:[#allocation2 + $0x638] sm:$0xff]
    %v2588 = vld [vmem:[#allocation2 + $0x640] sm:$0xff]
    %v2589 = vld [vmem:[#allocation2 + $0x648] sm:$0xff]
    %v2590 = vld [vmem:[#allocation2 + $0x650] sm:$0xff]
    %v2591 = vld [vmem:[#allocation2 + $0x658] sm:$0xff]
    %v2592 = vld [vmem:[#allocation2 + $0x660] sm:$0xff]
    %v2593 = vld [vmem:[#allocation2 + $0x668] sm:$0xff]
    %v2594 = vld [vmem:[#allocation2 + $0x670] sm:$0xff]
    %v2595 = vld [vmem:[#allocation2 + $0x678] sm:$0xff]
    %v2596 = vld [vmem:[#allocation2 + $0x680] sm:$0xff]
    %v2597 = vld [vmem:[#allocation2 + $0x688] sm:$0xff]
    %v2598 = vld [vmem:[#allocation2 + $0x690] sm:$0xff]
    %v2599 = vld [vmem:[#allocation2 + $0x698] sm:$0xff]
    %v2600 = vld [vmem:[#allocation2 + $0x6a0] sm:$0xff]
    %v2601 = vld [vmem:[#allocation2 + $0x6a8] sm:$0xff]
    %v2602 = vld [vmem:[#allocation2 + $0x6b0] sm:$0xff]
    %v2603 = vld [vmem:[#allocation2 + $0x6b8] sm:$0xff]
    %v2604 = vld [vmem:[#allocation2 + $0x6c0] sm:$0xff]
    %v2605 = vld [vmem:[#allocation2 + $0x6c8] sm:$0xff]
    %v2606 = vld [vmem:[#allocation2 + $0x6d0] sm:$0xff]
    %v2607 = vld [vmem:[#allocation2 + $0x6d8] sm:$0xff]
    %v2608 = vld [vmem:[#allocation2 + $0x6e0] sm:$0xff]
    %v2609 = vld [vmem:[#allocation2 + $0x6e8] sm:$0xff]
    %v2610 = vld [vmem:[#allocation2 + $0x6f0] sm:$0xff]
    %v2611 = vld [vmem:[#allocation2 + $0x6f8] sm:$0xff]
    %v2612 = vld [vmem:[#allocation2 + $0x700] sm:$0xff]
    %v2613 = vld [vmem:[#allocation2 + $0x708] sm:$0xff]
    %v2614 = vld [vmem:[#allocation2 + $0x710] sm:$0xff]
    %v2615 = vld [vmem:[#allocation2 + $0x718] sm:$0xff]
    %v2616 = vld [vmem:[#allocation2 + $0x720] sm:$0xff]
    %v2617 = vld [vmem:[#allocation2 + $0x728] sm:$0xff]
    %v2618 = vld [vmem:[#allocation2 + $0x730] sm:$0xff]
    %v2619 = vld [vmem:[#allocation2 + $0x738] sm:$0xff]
    %v2620 = vld [vmem:[#allocation2 + $0x740] sm:$0xff]
    %v2621 = vld [vmem:[#allocation2 + $0x748] sm:$0xff]
    %v2622 = vld [vmem:[#allocation2 + $0x750] sm:$0xff]
    %v2623 = vld [vmem:[#allocation2 + $0x758] sm:$0xff]
    %v2624 = vld [vmem:[#allocation2 + $0x760] sm:$0xff]
    %v2625 = vld [vmem:[#allocation2 + $0x768] sm:$0xff]
    %v2626 = vld [vmem:[#allocation2 + $0x770] sm:$0xff]
    %v2627 = vld [vmem:[#allocation2 + $0x778] sm:$0xff]
    %v2628 = vld [vmem:[#allocation2 + $0x780] sm:$0xff]
    %v2629 = vld [vmem:[#allocation2 + $0x788] sm:$0xff]
    %v2630 = vld [vmem:[#allocation2 + $0x790] sm:$0xff]
    %v2631 = vld [vmem:[#allocation2 + $0x798] sm:$0xff]
    %v2632 = vld [vmem:[#allocation2 + $0x7a0] sm:$0xff]
    %v2633 = vld [vmem:[#allocation2 + $0x7a8] sm:$0xff]
    %v2634 = vld [vmem:[#allocation2 + $0x7b0] sm:$0xff]
    %v2635 = vld [vmem:[#allocation2 + $0x7b8] sm:$0xff]
    %v2636 = vld [vmem:[#allocation2 + $0x7c0] sm:$0xff]
    %v2637 = vld [vmem:[#allocation2 + $0x7c8] sm:$0xff]
    %v2638 = vld [vmem:[#allocation2 + $0x7d0] sm:$0xff]
    %v2639 = vld [vmem:[#allocation2 + $0x7d8] sm:$0xff]
    %v2640 = vld [vmem:[#allocation2 + $0x7e0] sm:$0xff]
    %v2641 = vld [vmem:[#allocation2 + $0x7e8] sm:$0xff]
    %v2642 = vld [vmem:[#allocation2 + $0x7f0] sm:$0xff]
    %v2643 = vld [vmem:[#allocation2 + $0x7f8] sm:$0xff]
    %v2644 = vld [vmem:[#allocation2 + $0x800] sm:$0xff]
    %v2645 = vld [vmem:[#allocation2 + $0x808] sm:$0xff]
    %v2646 = vld [vmem:[#allocation2 + $0x810] sm:$0xff]
    %v2647 = vld [vmem:[#allocation2 + $0x818] sm:$0xff]
    %v2648 = vld [vmem:[#allocation2 + $0x820] sm:$0xff]
    %v2649 = vld [vmem:[#allocation2 + $0x828] sm:$0xff]
    %v2650 = vld [vmem:[#allocation2 + $0x830] sm:$0xff]
    %v2651 = vld [vmem:[#allocation2 + $0x838] sm:$0xff]
    %v2652 = vld [vmem:[#allocation2 + $0x840] sm:$0xff]
    %v2653 = vld [vmem:[#allocation2 + $0x848] sm:$0xff]
    %v2654 = vld [vmem:[#allocation2 + $0x850] sm:$0xff]
    %v2655 = vld [vmem:[#allocation2 + $0x858] sm:$0xff]
    %v2656 = vld [vmem:[#allocation2 + $0x860] sm:$0xff]
    %v2657 = vld [vmem:[#allocation2 + $0x868] sm:$0xff]
    %v2658 = vld [vmem:[#allocation2 + $0x870] sm:$0xff]
    %v2659 = vld [vmem:[#allocation2 + $0x878] sm:$0xff]
    %v2660 = vld [vmem:[#allocation2 + $0x880] sm:$0xff]
    %v2661 = vld [vmem:[#allocation2 + $0x888] sm:$0xff]
    %v2662 = vld [vmem:[#allocation2 + $0x890] sm:$0xff]
    %v2663 = vld [vmem:[#allocation2 + $0x898] sm:$0xff]
    %v2664 = vld [vmem:[#allocation2 + $0x8a0] sm:$0xff]
    %v2665 = vld [vmem:[#allocation2 + $0x8a8] sm:$0xff]
    %v2666 = vld [vmem:[#allocation2 + $0x8b0] sm:$0xff]
    %v2667 = vld [vmem:[#allocation2 + $0x8b8] sm:$0xff]
    %v2668 = vld [vmem:[#allocation2 + $0x8c0] sm:$0xff]
    %v2669 = vld [vmem:[#allocation2 + $0x8c8] sm:$0xff]
    %v2670 = vld [vmem:[#allocation2 + $0x8d0] sm:$0xff]
    %v2671 = vld [vmem:[#allocation2 + $0x8d8] sm:$0xff]
    %v2672 = vld [vmem:[#allocation2 + $0x8e0] sm:$0xff]
    %v2673 = vld [vmem:[#allocation2 + $0x8e8] sm:$0xff]
    %v2674 = vld [vmem:[#allocation2 + $0x8f0] sm:$0xff]
    %v2675 = vld [vmem:[#allocation2 + $0x8f8] sm:$0xff]
    %v2676 = vld [vmem:[#allocation10] sm:$0x3f]
    %v2678 = vlaneseq
    %v2679 = vshrl.u32 %v2678, 7
    %v2680 = vsub.s32 0, %v2679
    %v2681 = vrot.slane %v2676, %v2680
    %v2682 = vlaneseq
    %v2683 = vshrl.u32 %v2682, 7
    %v2684 = vsub.s32 1, %v2683
    %v2685 = vrot.slane %v2676, %v2684
    %v2686 = vlaneseq
    %v2687 = vshrl.u32 %v2686, 7
    %v2688 = vsub.s32 2, %v2687
    %v2689 = vrot.slane %v2676, %v2688
    %v2690 = vlaneseq
    %v2691 = vshrl.u32 %v2690, 7
    %v2692 = vsub.s32 3, %v2691
    %v2693 = vrot.slane %v2676, %v2692
    %v2694 = vlaneseq
    %v2695 = vshrl.u32 %v2694, 7
    %v2696 = vsub.s32 4, %v2695
    %v2697 = vrot.slane %v2676, %v2696
    %v2698 = vlaneseq
    %v2699 = vshrl.u32 %v2698, 7
    %v2700 = vsub.s32 5, %v2699
    %v2701 = vrot.slane %v2676, %v2700
    %2708 = vmatprep.subr.bf16.mxu0 %v2389
    %2709 = vmatpush1.bf16.msra.mxu0 %v2388
    %2710 = vmatprep.subr.bf16.mxu0 %v2395
    %2711 = vmatpush1.bf16.msra.mxu0 %v2394
    %2712 = vmatprep.subr.bf16.mxu0 %v2401
    %2713 = vmatpush1.bf16.msra.mxu0 %v2400
    %2714 = vmatprep.subr.bf16.mxu0 %v2407
    %2715 = vmatpush1.bf16.msra.mxu0 %v2406
    %2716 = vmatprep.subr.bf16.mxu0 %v2413
    %2717 = vmatpush1.bf16.msra.mxu0 %v2412
    %2718 = vmatprep.subr.bf16.mxu0 %v2419
    %2719 = vmatpush1.bf16.msra.mxu0 %v2418
    %2720 = vmatprep.subr.bf16.mxu0 %v2425
    %2721 = vmatpush1.bf16.msra.mxu0 %v2424
    %2722 = vmatprep.subr.bf16.mxu0 %v2431
    %2723 = vmatpush1.bf16.msra.mxu0 %v2430
    %2724 = vmatprep.subr.bf16.mxu0 %v2437
    %2725 = vmatpush1.bf16.msra.mxu0 %v2436
    %2726 = vmatprep.subr.bf16.mxu0 %v2443
    %2727 = vmatpush1.bf16.msra.mxu0 %v2442
    %2728 = vmatprep.subr.bf16.mxu0 %v2449
    %2729 = vmatpush1.bf16.msra.mxu0 %v2448
    %2730 = vmatprep.subr.bf16.mxu0 %v2455
    %2731 = vmatpush1.bf16.msra.mxu0 %v2454
    %2732 = vmatprep.subr.bf16.mxu0 %v2461
    %2733 = vmatpush1.bf16.msra.mxu0 %v2460
    %2734 = vmatprep.subr.bf16.mxu0 %v2467
    %2735 = vmatpush1.bf16.msra.mxu0 %v2466
    %2736 = vmatprep.subr.bf16.mxu0 %v2473
    %2737 = vmatpush1.bf16.msra.mxu0 %v2472
    %2738 = vmatprep.subr.bf16.mxu0 %v2479
    %2739 = vmatpush1.bf16.msra.mxu0 %v2478
    %2740 = vmatprep.mubr.bf16.mxu0 %v2383
    %2741 = vmatmul.mubr.bf16.gmra.mrb[0].mxu0 %v2382
    %v2742 = vpop.f32.mrb[0].mxu0
    %v2743 = vadd.f32 %v2681, %v2742
    %v2744 = vpop.f32.mrb[0].mxu0
    %v2745 = vadd.f32 %v2685, %v2744
    %v2746 = vpop.f32.mrb[0].mxu0
    %v2747 = vadd.f32 %v2681, %v2746
    %v2748 = vpop.f32.mrb[0].mxu0
    %v2749 = vadd.f32 %v2685, %v2748
    %2750 = vdwg.mxu0
    %2751 = vmatprep.subr.bf16.mxu0 %v2485
    %2752 = vmatpush1.bf16.msra.mxu0 %v2484
    %2753 = vmatprep.subr.bf16.mxu0 %v2491
    %2754 = vmatpush1.bf16.msra.mxu0 %v2490
    %2755 = vmatprep.subr.bf16.mxu0 %v2497
    %2756 = vmatpush1.bf16.msra.mxu0 %v2496
    %2757 = vmatprep.subr.bf16.mxu0 %v2503
    %2758 = vmatpush1.bf16.msra.mxu0 %v2502
    %2759 = vmatprep.subr.bf16.mxu0 %v2509
    %2760 = vmatpush1.bf16.msra.mxu0 %v2508
    %2761 = vmatprep.subr.bf16.mxu0 %v2515
    %2762 = vmatpush1.bf16.msra.mxu0 %v2514
    %2763 = vmatprep.subr.bf16.mxu0 %v2521
    %2764 = vmatpush1.bf16.msra.mxu0 %v2520
    %2765 = vmatprep.subr.bf16.mxu0 %v2527
    %2766 = vmatpush1.bf16.msra.mxu0 %v2526
    %2767 = vmatprep.subr.bf16.mxu0 %v2533
    %2768 = vmatpush1.bf16.msra.mxu0 %v2532
    %2769 = vmatprep.subr.bf16.mxu0 %v2539
    %2770 = vmatpush1.bf16.msra.mxu0 %v2538
    %2771 = vmatprep.subr.bf16.mxu0 %v2545
    %2772 = vmatpush1.bf16.msra.mxu0 %v2544
    %2773 = vmatprep.subr.bf16.mxu0 %v2551
    %2774 = vmatpush1.bf16.msra.mxu0 %v2550
    %2775 = vmatprep.subr.bf16.mxu0 %v2557
    %2776 = vmatpush1.bf16.msra.mxu0 %v2556
    %2777 = vmatprep.subr.bf16.mxu0 %v2563
    %2778 = vmatpush1.bf16.msra.mxu0 %v2562
    %2779 = vmatprep.subr.bf16.mxu0 %v2569
    %2780 = vmatpush1.bf16.msra.mxu0 %v2568
    %2781 = vmatprep.subr.bf16.mxu0 %v2575
    %2782 = vmatpush1.bf16.msra.mxu0 %v2574
    %2783 = vmatprep.mubr.bf16.mxu0 %v2385
    %2784 = vmatmul.mubr.bf16.gmra.mrb[0].mxu0 %v2384
    %v2785 = vpop.f32.mrb[0].mxu0
    %v2786 = vadd.f32 %v2743, %v2785
    %v2787 = vpop.f32.mrb[0].mxu0
    %v2788 = vadd.f32 %v2745, %v2787
    %v2789 = vpop.f32.mrb[0].mxu0
    %v2790 = vadd.f32 %v2747, %v2789
    %v2791 = vpop.f32.mrb[0].mxu0
    %v2792 = vadd.f32 %v2749, %v2791
    %2793 = vdwg.mxu0
    %2794 = vmatprep.subr.bf16.mxu0 %v2581
    %2795 = vmatpush1.bf16.msra.mxu0 %v2580
    %2796 = vmatprep.subr.bf16.mxu0 %v2587
    %2797 = vmatpush1.bf16.msra.mxu0 %v2586
    %2798 = vmatprep.subr.bf16.mxu0 %v2593
    %2799 = vmatpush1.bf16.msra.mxu0 %v2592
    %2800 = vmatprep.subr.bf16.mxu0 %v2599
    %2801 = vmatpush1.bf16.msra.mxu0 %v2598
    %2802 = vmatprep.subr.bf16.mxu0 %v2605
    %2803 = vmatpush1.bf16.msra.mxu0 %v2604
    %2804 = vmatprep.subr.bf16.mxu0 %v2611
    %2805 = vmatpush1.bf16.msra.mxu0 %v2610
    %2806 = vmatprep.subr.bf16.mxu0 %v2617
    %2807 = vmatpush1.bf16.msra.mxu0 %v2616
    %2808 = vmatprep.subr.bf16.mxu0 %v2623
    %2809 = vmatpush1.bf16.msra.mxu0 %v2622
    %2810 = vmatprep.subr.bf16.mxu0 %v2629
    %2811 = vmatpush1.bf16.msra.mxu0 %v2628
    %2812 = vmatprep.subr.bf16.mxu0 %v2635
    %2813 = vmatpush1.bf16.msra.mxu0 %v2634
    %2814 = vmatprep.subr.bf16.mxu0 %v2641
    %2815 = vmatpush1.bf16.msra.mxu0 %v2640
    %2816 = vmatprep.subr.bf16.mxu0 %v2647
    %2817 = vmatpush1.bf16.msra.mxu0 %v2646
    %2818 = vmatprep.subr.bf16.mxu0 %v2653
    %2819 = vmatpush1.bf16.msra.mxu0 %v2652
    %2820 = vmatprep.subr.bf16.mxu0 %v2659
    %2821 = vmatpush1.bf16.msra.mxu0 %v2658
    %2822 = vmatprep.subr.bf16.mxu0 %v2665
    %2823 = vmatpush1.bf16.msra.mxu0 %v2664
    %2824 = vmatprep.subr.bf16.mxu0 %v2671
    %2825 = vmatpush1.bf16.msra.mxu0 %v2670
    %2826 = vmatprep.mubr.bf16.mxu0 %v2387
    %2827 = vmatmul.mubr.bf16.gmra.mrb[0].mxu0 %v2386
    %v2828 = vpop.f32.mrb[0].mxu0
    %v2829 = vadd.f32 %v2786, %v2828
    %v2830 = vpop.f32.mrb[0].mxu0
    %v2831 = vadd.f32 %v2788, %v2830
    %v2832 = vpop.f32.mrb[0].mxu0
    %v2833 = vadd.f32 %v2790, %v2832
    %v2834 = vpop.f32.mrb[0].mxu0
    %v2835 = vadd.f32 %v2792, %v2834
    %2836 = vdwg.mxu0
    %2837 = vmatprep.subr.bf16.mxu0 %v2391
    %2838 = vmatpush1.bf16.msra.mxu0 %v2390
    %2839 = vmatprep.subr.bf16.mxu0 %v2397
    %2840 = vmatpush1.bf16.msra.mxu0 %v2396
    %2841 = vmatprep.subr.bf16.mxu0 %v2403
    %2842 = vmatpush1.bf16.msra.mxu0 %v2402
    %2843 = vmatprep.subr.bf16.mxu0 %v2409
    %2844 = vmatpush1.bf16.msra.mxu0 %v2408
    %2845 = vmatprep.subr.bf16.mxu0 %v2415
    %2846 = vmatpush1.bf16.msra.mxu0 %v2414
    %2847 = vmatprep.subr.bf16.mxu0 %v2421
    %2848 = vmatpush1.bf16.msra.mxu0 %v2420
    %2849 = vmatprep.subr.bf16.mxu0 %v2427
    %2850 = vmatpush1.bf16.msra.mxu0 %v2426
    %2851 = vmatprep.subr.bf16.mxu0 %v2433
    %2852 = vmatpush1.bf16.msra.mxu0 %v2432
    %2853 = vmatprep.subr.bf16.mxu0 %v2439
    %2854 = vmatpush1.bf16.msra.mxu0 %v2438
    %2855 = vmatprep.subr.bf16.mxu0 %v2445
    %2856 = vmatpush1.bf16.msra.mxu0 %v2444
    %2857 = vmatprep.subr.bf16.mxu0 %v2451
    %2858 = vmatpush1.bf16.msra.mxu0 %v2450
    %2859 = vmatprep.subr.bf16.mxu0 %v2457
    %2860 = vmatpush1.bf16.msra.mxu0 %v2456
    %2861 = vmatprep.subr.bf16.mxu0 %v2463
    %2862 = vmatpush1.bf16.msra.mxu0 %v2462
    %2863 = vmatprep.subr.bf16.mxu0 %v2469
    %2864 = vmatpush1.bf16.msra.mxu0 %v2468
    %2865 = vmatprep.subr.bf16.mxu0 %v2475
    %2866 = vmatpush1.bf16.msra.mxu0 %v2474
    %2867 = vmatprep.subr.bf16.mxu0 %v2481
    %2868 = vmatpush1.bf16.msra.mxu0 %v2480
    %2869 = vmatprep.mubr.bf16.mxu0 %v2383
    %2870 = vmatmul.mubr.bf16.gmra.mrb[0].mxu0 %v2382
    %v2871 = vpop.f32.mrb[0].mxu0
    %v2872 = vadd.f32 %v2689, %v2871
    %v2873 = vpop.f32.mrb[0].mxu0
    %v2874 = vadd.f32 %v2693, %v2873
    %v2875 = vpop.f32.mrb[0].mxu0
    %v2876 = vadd.f32 %v2689, %v2875
    %v2877 = vpop.f32.mrb[0].mxu0
    %v2878 = vadd.f32 %v2693, %v2877
    %2879 = vdwg.mxu0
    %2880 = vmatprep.subr.bf16.mxu0 %v2487
    %2881 = vmatpush1.bf16.msra.mxu0 %v2486
    %2882 = vmatprep.subr.bf16.mxu0 %v2493
    %2883 = vmatpush1.bf16.msra.mxu0 %v2492
    %2884 = vmatprep.subr.bf16.mxu0 %v2499
    %2885 = vmatpush1.bf16.msra.mxu0 %v2498
    %2886 = vmatprep.subr.bf16.mxu0 %v2505
    %2887 = vmatpush1.bf16.msra.mxu0 %v2504
    %2888 = vmatprep.subr.bf16.mxu0 %v2511
    %2889 = vmatpush1.bf16.msra.mxu0 %v2510
    %2890 = vmatprep.subr.bf16.mxu0 %v2517
    %2891 = vmatpush1.bf16.msra.mxu0 %v2516
    %2892 = vmatprep.subr.bf16.mxu0 %v2523
    %2893 = vmatpush1.bf16.msra.mxu0 %v2522
    %2894 = vmatprep.subr.bf16.mxu0 %v2529
    %2895 = vmatpush1.bf16.msra.mxu0 %v2528
    %2896 = vmatprep.subr.bf16.mxu0 %v2535
    %2897 = vmatpush1.bf16.msra.mxu0 %v2534
    %2898 = vmatprep.subr.bf16.mxu0 %v2541
    %2899 = vmatpush1.bf16.msra.mxu0 %v2540
    %2900 = vmatprep.subr.bf16.mxu0 %v2547
    %2901 = vmatpush1.bf16.msra.mxu0 %v2546
    %2902 = vmatprep.subr.bf16.mxu0 %v2553
    %2903 = vmatpush1.bf16.msra.mxu0 %v2552
    %2904 = vmatprep.subr.bf16.mxu0 %v2559
    %2905 = vmatpush1.bf16.msra.mxu0 %v2558
    %2906 = vmatprep.subr.bf16.mxu0 %v2565
    %2907 = vmatpush1.bf16.msra.mxu0 %v2564
    %2908 = vmatprep.subr.bf16.mxu0 %v2571
    %2909 = vmatpush1.bf16.msra.mxu0 %v2570
    %2910 = vmatprep.subr.bf16.mxu0 %v2577
    %2911 = vmatpush1.bf16.msra.mxu0 %v2576
    %2912 = vmatprep.mubr.bf16.mxu0 %v2385
    %2913 = vmatmul.mubr.bf16.gmra.mrb[0].mxu0 %v2384
    %v2914 = vpop.f32.mrb[0].mxu0
    %v2915 = vadd.f32 %v2872, %v2914
    %v2916 = vpop.f32.mrb[0].mxu0
    %v2917 = vadd.f32 %v2874, %v2916
    %v2918 = vpop.f32.mrb[0].mxu0
    %v2919 = vadd.f32 %v2876, %v2918
    %v2920 = vpop.f32.mrb[0].mxu0
    %v2921 = vadd.f32 %v2878, %v2920
    %2922 = vdwg.mxu0
    %2923 = vmatprep.subr.bf16.mxu0 %v2583
    %2924 = vmatpush1.bf16.msra.mxu0 %v2582
    %2925 = vmatprep.subr.bf16.mxu0 %v2589
    %2926 = vmatpush1.bf16.msra.mxu0 %v2588
    %2927 = vmatprep.subr.bf16.mxu0 %v2595
    %2928 = vmatpush1.bf16.msra.mxu0 %v2594
    %2929 = vmatprep.subr.bf16.mxu0 %v2601
    %2930 = vmatpush1.bf16.msra.mxu0 %v2600
    %2931 = vmatprep.subr.bf16.mxu0 %v2607
    %2932 = vmatpush1.bf16.msra.mxu0 %v2606
    %2933 = vmatprep.subr.bf16.mxu0 %v2613
    %2934 = vmatpush1.bf16.msra.mxu0 %v2612
    %2935 = vmatprep.subr.bf16.mxu0 %v2619
    %2936 = vmatpush1.bf16.msra.mxu0 %v2618
    %2937 = vmatprep.subr.bf16.mxu0 %v2625
    %2938 = vmatpush1.bf16.msra.mxu0 %v2624
    %2939 = vmatprep.subr.bf16.mxu0 %v2631
    %2940 = vmatpush1.bf16.msra.mxu0 %v2630
    %2941 = vmatprep.subr.bf16.mxu0 %v2637
    %2942 = vmatpush1.bf16.msra.mxu0 %v2636
    %2943 = vmatprep.subr.bf16.mxu0 %v2643
    %2944 = vmatpush1.bf16.msra.mxu0 %v2642
    %2945 = vmatprep.subr.bf16.mxu0 %v2649
    %2946 = vmatpush1.bf16.msra.mxu0 %v2648
    %2947 = vmatprep.subr.bf16.mxu0 %v2655
    %2948 = vmatpush1.bf16.msra.mxu0 %v2654
    %2949 = vmatprep.subr.bf16.mxu0 %v2661
    %2950 = vmatpush1.bf16.msra.mxu0 %v2660
    %2951 = vmatprep.subr.bf16.mxu0 %v2667
    %2952 = vmatpush1.bf16.msra.mxu0 %v2666
    %2953 = vmatprep.subr.bf16.mxu0 %v2673
    %2954 = vmatpush1.bf16.msra.mxu0 %v2672
    %2955 = vmatprep.mubr.bf16.mxu0 %v2387
    %2956 = vmatmul.mubr.bf16.gmra.mrb[0].mxu0 %v2386
    %v2957 = vpop.f32.mrb[0].mxu0
    %v2958 = vadd.f32 %v2915, %v2957
    %v2959 = vpop.f32.mrb[0].mxu0
    %v2960 = vadd.f32 %v2917, %v2959
    %v2961 = vpop.f32.mrb[0].mxu0
    %v2962 = vadd.f32 %v2919, %v2961
    %v2963 = vpop.f32.mrb[0].mxu0
    %v2964 = vadd.f32 %v2921, %v2963
    %2965 = vdwg.mxu0
    %2966 = vmatprep.subr.bf16.mxu0 %v2393
    %2967 = vmatpush1.bf16.msra.mxu0 %v2392
    %2968 = vmatprep.subr.bf16.mxu0 %v2399
    %2969 = vmatpush1.bf16.msra.mxu0 %v2398
    %2970 = vmatprep.subr.bf16.mxu0 %v2405
    %2971 = vmatpush1.bf16.msra.mxu0 %v2404
    %2972 = vmatprep.subr.bf16.mxu0 %v2411
    %2973 = vmatpush1.bf16.msra.mxu0 %v2410
    %2974 = vmatprep.subr.bf16.mxu0 %v2417
    %2975 = vmatpush1.bf16.msra.mxu0 %v2416
    %2976 = vmatprep.subr.bf16.mxu0 %v2423
    %2977 = vmatpush1.bf16.msra.mxu0 %v2422
    %2978 = vmatprep.subr.bf16.mxu0 %v2429
    %2979 = vmatpush1.bf16.msra.mxu0 %v2428
    %2980 = vmatprep.subr.bf16.mxu0 %v2435
    %2981 = vmatpush1.bf16.msra.mxu0 %v2434
    %2982 = vmatprep.subr.bf16.mxu0 %v2441
    %2983 = vmatpush1.bf16.msra.mxu0 %v2440
    %2984 = vmatprep.subr.bf16.mxu0 %v2447
    %2985 = vmatpush1.bf16.msra.mxu0 %v2446
    %2986 = vmatprep.subr.bf16.mxu0 %v2453
    %2987 = vmatpush1.bf16.msra.mxu0 %v2452
    %2988 = vmatprep.subr.bf16.mxu0 %v2459
    %2989 = vmatpush1.bf16.msra.mxu0 %v2458
    %2990 = vmatprep.subr.bf16.mxu0 %v2465
    %2991 = vmatpush1.bf16.msra.mxu0 %v2464
    %2992 = vmatprep.subr.bf16.mxu0 %v2471
    %2993 = vmatpush1.bf16.msra.mxu0 %v2470
    %2994 = vmatprep.subr.bf16.mxu0 %v2477
    %2995 = vmatpush1.bf16.msra.mxu0 %v2476
    %2996 = vmatprep.subr.bf16.mxu0 %v2483
    %2997 = vmatpush1.bf16.msra.mxu0 %v2482
    %2998 = vmatprep.mubr.bf16.mxu0 %v2383
    %2999 = vmatmul.mubr.bf16.gmra.mrb[0].mxu0 %v2382
    %v3000 = vpop.f32.mrb[0].mxu0
    %v3001 = vadd.f32 %v2697, %v3000
    %v3002 = vpop.f32.mrb[0].mxu0
    %v3003 = vadd.f32 %v2701, %v3002
    %v3004 = vpop.f32.mrb[0].mxu0
    %v3005 = vadd.f32 %v2697, %v3004
    %v3006 = vpop.f32.mrb[0].mxu0
    %v3007 = vadd.f32 %v2701, %v3006
    %3008 = vdwg.mxu0
    %3009 = vmatprep.subr.bf16.mxu0 %v2489
    %3010 = vmatpush1.bf16.msra.mxu0 %v2488
    %3011 = vmatprep.subr.bf16.mxu0 %v2495
    %3012 = vmatpush1.bf16.msra.mxu0 %v2494
    %3013 = vmatprep.subr.bf16.mxu0 %v2501
    %3014 = vmatpush1.bf16.msra.mxu0 %v2500
    %3015 = vmatprep.subr.bf16.mxu0 %v2507
    %3016 = vmatpush1.bf16.msra.mxu0 %v2506
    %3017 = vmatprep.subr.bf16.mxu0 %v2513
    %3018 = vmatpush1.bf16.msra.mxu0 %v2512
    %3019 = vmatprep.subr.bf16.mxu0 %v2519
    %3020 = vmatpush1.bf16.msra.mxu0 %v2518
    %3021 = vmatprep.subr.bf16.mxu0 %v2525
    %3022 = vmatpush1.bf16.msra.mxu0 %v2524
    %3023 = vmatprep.subr.bf16.mxu0 %v2531
    %3024 = vmatpush1.bf16.msra.mxu0 %v2530
    %3025 = vmatprep.subr.bf16.mxu0 %v2537
    %3026 = vmatpush1.bf16.msra.mxu0 %v2536
    %3027 = vmatprep.subr.bf16.mxu0 %v2543
    %3028 = vmatpush1.bf16.msra.mxu0 %v2542
    %3029 = vmatprep.subr.bf16.mxu0 %v2549
    %3030 = vmatpush1.bf16.msra.mxu0 %v2548
    %3031 = vmatprep.subr.bf16.mxu0 %v2555
    %3032 = vmatpush1.bf16.msra.mxu0 %v2554
    %3033 = vmatprep.subr.bf16.mxu0 %v2561
    %3034 = vmatpush1.bf16.msra.mxu0 %v2560
    %3035 = vmatprep.subr.bf16.mxu0 %v2567
    %3036 = vmatpush1.bf16.msra.mxu0 %v2566
    %3037 = vmatprep.subr.bf16.mxu0 %v2573
    %3038 = vmatpush1.bf16.msra.mxu0 %v2572
    %3039 = vmatprep.subr.bf16.mxu0 %v2579
    %3040 = vmatpush1.bf16.msra.mxu0 %v2578
    %3041 = vmatprep.mubr.bf16.mxu0 %v2385
    %3042 = vmatmul.mubr.bf16.gmra.mrb[0].mxu0 %v2384
    %v3043 = vpop.f32.mrb[0].mxu0
    %v3044 = vadd.f32 %v3001, %v3043
    %v3045 = vpop.f32.mrb[0].mxu0
    %v3046 = vadd.f32 %v3003, %v3045
    %v3047 = vpop.f32.mrb[0].mxu0
    %v3048 = vadd.f32 %v3005, %v3047
    %v3049 = vpop.f32.mrb[0].mxu0
    %v3050 = vadd.f32 %v3007, %v3049
    %3051 = vdwg.mxu0
    %3052 = vmatprep.subr.bf16.mxu0 %v2585
    %3053 = vmatpush1.bf16.msra.mxu0 %v2584
    %3054 = vmatprep.subr.bf16.mxu0 %v2591
    %3055 = vmatpush1.bf16.msra.mxu0 %v2590
    %3056 = vmatprep.subr.bf16.mxu0 %v2597
    %3057 = vmatpush1.bf16.msra.mxu0 %v2596
    %3058 = vmatprep.subr.bf16.mxu0 %v2603
    %3059 = vmatpush1.bf16.msra.mxu0 %v2602
    %3060 = vmatprep.subr.bf16.mxu0 %v2609
    %3061 = vmatpush1.bf16.msra.mxu0 %v2608
    %3062 = vmatprep.subr.bf16.mxu0 %v2615
    %3063 = vmatpush1.bf16.msra.mxu0 %v2614
    %3064 = vmatprep.subr.bf16.mxu0 %v2621
    %3065 = vmatpush1.bf16.msra.mxu0 %v2620
    %3066 = vmatprep.subr.bf16.mxu0 %v2627
    %3067 = vmatpush1.bf16.msra.mxu0 %v2626
    %3068 = vmatprep.subr.bf16.mxu0 %v2633
    %3069 = vmatpush1.bf16.msra.mxu0 %v2632
    %3070 = vmatprep.subr.bf16.mxu0 %v2639
    %3071 = vmatpush1.bf16.msra.mxu0 %v2638
    %3072 = vmatprep.subr.bf16.mxu0 %v2645
    %3073 = vmatpush1.bf16.msra.mxu0 %v2644
    %3074 = vmatprep.subr.bf16.mxu0 %v2651
    %3075 = vmatpush1.bf16.msra.mxu0 %v2650
    %3076 = vmatprep.subr.bf16.mxu0 %v2657
    %3077 = vmatpush1.bf16.msra.mxu0 %v2656
    %3078 = vmatprep.subr.bf16.mxu0 %v2663
    %3079 = vmatpush1.bf16.msra.mxu0 %v2662
    %3080 = vmatprep.subr.bf16.mxu0 %v2669
    %3081 = vmatpush1.bf16.msra.mxu0 %v2668
    %3082 = vmatprep.subr.bf16.mxu0 %v2675
    %3083 = vmatpush1.bf16.msra.mxu0 %v2674
    %3084 = vmatprep.mubr.bf16.mxu0 %v2387
    %3085 = vmatmul.mubr.bf16.gmra.mrb[0].mxu0 %v2386
    %v3086 = vpop.f32.mrb[0].mxu0
    %v3087 = vadd.f32 %v3044, %v3086
    %v3088 = vpop.f32.mrb[0].mxu0
    %v3089 = vadd.f32 %v3046, %v3088
    %v3090 = vpop.f32.mrb[0].mxu0
    %v3091 = vadd.f32 %v3048, %v3090
    %v3092 = vpop.f32.mrb[0].mxu0
    %v3093 = vadd.f32 %v3050, %v3092
    %3094 = vdwg.mxu0
    %v3095 = vmul.f32 %v2829, %v2829
    %v3096 = vmul.f32 %v2831, %v2831
    %v3097 = vmul.f32 %v2958, %v2958
    %v3098 = vmul.f32 %v2960, %v2960
    %v3099 = vmul.f32 %v3087, %v3087
    %v3100 = vmul.f32 %v3089, %v3089
    %v3101 = vmul.f32 %v2833, %v2833
    %v3102 = vmul.f32 %v2835, %v2835
    %v3103 = vmul.f32 %v2962, %v2962
    %v3104 = vmul.f32 %v2964, %v2964
    %v3105 = vmul.f32 %v3091, %v3091
    %v3106 = vmul.f32 %v3093, %v3093
    %v3107 = vmul.f32 %v2829, %v3095
    %v3108 = vmul.f32 %v2831, %v3096
    %v3109 = vmul.f32 %v2958, %v3097
    %v3110 = vmul.f32 %v2960, %v3098
    %v3111 = vmul.f32 %v3087, %v3099
    %v3112 = vmul.f32 %v3089, %v3100
    %v3113 = vmul.f32 %v2833, %v3101
    %v3114 = vmul.f32 %v2835, %v3102
    %v3115 = vmul.f32 %v2962, %v3103
    %v3116 = vmul.f32 %v2964, %v3104
    %v3117 = vmul.f32 %v3091, %v3105
    %v3118 = vmul.f32 %v3093, %v3106
    %v3119 = vmul.f32 %v3107, 0.044715
    %v3120 = vmul.f32 %v3108, 0.044715
    %v3121 = vmul.f32 %v3109, 0.044715
    %v3122 = vmul.f32 %v3110, 0.044715
    %v3123 = vmul.f32 %v3111, 0.044715
    %v3124 = vmul.f32 %v3112, 0.044715
    %v3125 = vmul.f32 %v3113, 0.044715
    %v3126 = vmul.f32 %v3114, 0.044715
    %v3127 = vmul.f32 %v3115, 0.044715
    %v3128 = vmul.f32 %v3116, 0.044715
    %v3129 = vmul.f32 %v3117, 0.044715
    %v3130 = vmul.f32 %v3118, 0.044715
    %v3131 = vadd.f32 %v2829, %v3119
    %v3132 = vadd.f32 %v2831, %v3120
    %v3133 = vadd.f32 %v2958, %v3121
    %v3134 = vadd.f32 %v2960, %v3122
    %v3135 = vadd.f32 %v3087, %v3123
    %v3136 = vadd.f32 %v3089, %v3124
    %v3137 = vadd.f32 %v2833, %v3125
    %v3138 = vadd.f32 %v2835, %v3126
    %v3139 = vadd.f32 %v2962, %v3127
    %v3140 = vadd.f32 %v2964, %v3128
    %v3141 = vadd.f32 %v3091, %v3129
    %v3142 = vadd.f32 %v3093, %v3130
    %v3143 = vmul.f32 %v3131, 0.7978846
    %v3144 = vmul.f32 %v3132, 0.7978846
    %v3145 = vmul.f32 %v3133, 0.7978846
    %v3146 = vmul.f32 %v3134, 0.7978846
    %v3147 = vmul.f32 %v3135, 0.7978846
    %v3148 = vmul.f32 %v3136, 0.7978846
    %v3149 = vmul.f32 %v3137, 0.7978846
    %v3150 = vmul.f32 %v3138, 0.7978846
    %v3151 = vmul.f32 %v3139, 0.7978846
    %v3152 = vmul.f32 %v3140, 0.7978846
    %v3153 = vmul.f32 %v3141, 0.7978846
    %v3154 = vmul.f32 %v3142, 0.7978846
    %v3155 = vtanh.pop %v3143
    %v3156 = vtanh.pop %v3144
    %v3157 = vtanh.pop %v3145
    %v3158 = vtanh.pop %v3146
    %v3159 = vtanh.pop %v3147
    %v3160 = vtanh.pop %v3148
    %v3161 = vtanh.pop %v3149
    %v3162 = vtanh.pop %v3150
    %v3163 = vtanh.pop %v3151
    %v3164 = vtanh.pop %v3152
    %v3165 = vtanh.pop %v3153
    %v3166 = vtanh.pop %v3154
    %v3167 = vadd.f32 %v3155, 1.0
    %v3168 = vadd.f32 %v3156, 1.0
    %v3169 = vadd.f32 %v3157, 1.0
    %v3170 = vadd.f32 %v3158, 1.0
    %v3171 = vadd.f32 %v3159, 1.0
    %v3172 = vadd.f32 %v3160, 1.0
    %v3173 = vadd.f32 %v3161, 1.0
    %v3174 = vadd.f32 %v3162, 1.0
    %v3175 = vadd.f32 %v3163, 1.0
    %v3176 = vadd.f32 %v3164, 1.0
    %v3177 = vadd.f32 %v3165, 1.0
    %v3178 = vadd.f32 %v3166, 1.0
    %v3179 = vmul.f32 %v3167, 0.5
    %v3180 = vmul.f32 %v3168, 0.5
    %v3181 = vmul.f32 %v3169, 0.5
    %v3182 = vmul.f32 %v3170, 0.5
    %v3183 = vmul.f32 %v3171, 0.5
    %v3184 = vmul.f32 %v3172, 0.5
    %v3185 = vmul.f32 %v3173, 0.5
    %v3186 = vmul.f32 %v3174, 0.5
    %v3187 = vmul.f32 %v3175, 0.5
    %v3188 = vmul.f32 %v3176, 0.5
    %v3189 = vmul.f32 %v3177, 0.5
    %v3190 = vmul.f32 %v3178, 0.5
    %v3191 = vmul.f32 %v2829, %v3179
    %v3192 = vmul.f32 %v2831, %v3180
    %v3193 = vmul.f32 %v2958, %v3181
    %v3194 = vmul.f32 %v2960, %v3182
    %v3195 = vmul.f32 %v3087, %v3183
    %v3196 = vmul.f32 %v3089, %v3184
    %v3197 = vmul.f32 %v2833, %v3185
    %v3198 = vmul.f32 %v2835, %v3186
    %v3199 = vmul.f32 %v2962, %v3187
    %v3200 = vmul.f32 %v2964, %v3188
    %v3201 = vmul.f32 %v3091, %v3189
    %v3202 = vmul.f32 %v3093, %v3190
    %3203 = vst [vmem:[#allocation12] sm:$0xff] %v3191
    %3204 = vst [vmem:[#allocation12 + $0x8] sm:$0xff] %v3192
    %3205 = vst [vmem:[#allocation12 + $0x10] sm:$0xff] %v3193
    %3206 = vst [vmem:[#allocation12 + $0x18] sm:$0xff] %v3194
    %3207 = vst [vmem:[#allocation12 + $0x20] sm:$0xff] %v3195
    %3208 = vst [vmem:[#allocation12 + $0x28] sm:$0xff] %v3196
    %3209 = vst [vmem:[#allocation12 + $0x30] sm:$0xff] %v3197
    %3210 = vst [vmem:[#allocation12 + $0x38] sm:$0xff] %v3198
    %3211 = vst [vmem:[#allocation12 + $0x40] sm:$0xff] %v3199
    %3212 = vst [vmem:[#allocation12 + $0x48] sm:$0xff] %v3200
    %3213 = vst [vmem:[#allocation12 + $0x50] sm:$0xff] %v3201
    %3214 = vst [vmem:[#allocation12 + $0x58] sm:$0xff] %v3202
    // Predicated region
    $region34: #{tpu_custom_call.1} parent=1 // pred_check
      _
    $region35: #{tpu_custom_call.1} parent=1 // pred_check_branch
      %3216 = sbr.rel (0) target = $region37
    $region36: #{tpu_custom_call.1} parent=1 // pred_region
      %s3218 = ssub.s32 1536, 1536
      %3219 = vsyncadd [#allocation6], %s3218
      %s3220 = sshll.u32 [#allocation12], 4
      %s3221 = int_to_ptr.vmem [resolvable:$true] %s3220
      %3226 = dma.vmem_to_hbm [thread:$0]  %s3221, 1536, %s5, [#allocation6], 768, 768, 48
    $region37: #{tpu_custom_call.1} parent=1 // pred_fallthru
      _
    // Predicated region
    $region38: #{tpu_custom_call.1} parent=1 // pred_check
      _
    $region39: #{tpu_custom_call.1} parent=1 // pred_check_branch
      %3228 = sbr.rel (0) target = $region41
    $region40: #{tpu_custom_call.1} parent=1 // pred_region
      %3229 = dma.done [#allocation6], 1536
    $region41: #{tpu_custom_call.1} parent=1 // pred_fallthru
      _
    %3230 = vsyncpa [#allocation5], 1
    %3231 = vsyncpa [#allocation8], 1
    %3232 = vsyncpa [#allocation11], 1
    %3233 = vsyncpa [#allocation6], 1
  %3234 = vsyncmov [#allocation3]
  %s3235 = vpop.sfrf %3234
  %p3236 = scmp.eq.s32.totalorder %s3235, 0
  %p3237 = pneg %p3236
  %3239 = shalt.err (%p3237)

</llo_original>
